<compile_context>
chip_gen: v7x
topology: tpu7x:2x2x1
jax: 0.10.0
libtpu: 0.0.40
codegen_flags: <defaults>
</compile_context>

<pallas_src>
import jax
import jax.numpy as jnp
from jax.experimental import pallas as pl
from jax.experimental.pallas import tpu as pltpu

LANE = 128


def decomposable_attention_kernel(
    a_ref, b_ref,
    wf_ref, bf_ref,      # Attend.f      : [wf1; wf2]            , [bf1; bf2]
    wg_ref, bg_ref,      # Compare.g     : [wg1_A; wg1_beta; wg2], [bg1; bg2]
    wh_ref, bh_ref,      # Aggregate.h   : [wh1_A; wh1_B; wh2]   , [bh1; bh2]
    wo_ref, bo_ref,      # Aggregate.linear
    out_ref,
):
    G, La, E = a_ref.shape           # E, H are already lane-padded (mult of 128)
    Lb = b_ref.shape[1]
    H = wf_ref.shape[1]
    f32, bf16 = jnp.float32, jnp.bfloat16

    def dot(x, w):  # bf16 MXU inputs, f32 accumulation
        return jnp.dot(x.astype(bf16), w, preferred_element_type=f32)

    def softmax_last(x):
        m = jnp.max(x, axis=-1, keepdims=True)
        p = jnp.exp(x - m)
        s = jnp.sum(p, axis=-1, keepdims=True)
        return p * pl.reciprocal(s, approx=True)

    A = a_ref[...]                              # (G, La, E) bf16
    B = b_ref[...]                              # (G, Lb, E) bf16
    A2 = A.reshape(G * La, E)
    B2 = B.reshape(G * Lb, E)

    # ---- Attend: f(A), f(B)  (Dropout = identity) ----
    wf1, wf2 = wf_ref[:E], wf_ref[E:]
    bf1, bf2 = bf_ref[0:1], bf_ref[1:2]
    f_A = jnp.maximum(dot(jnp.maximum(dot(A2, wf1) + bf1, 0.0), wf2) + bf2, 0.0)
    f_B = jnp.maximum(dot(jnp.maximum(dot(B2, wf1) + bf1, 0.0), wf2) + bf2, 0.0)
    fAb = f_A.reshape(G, La, H).astype(bf16)
    fBb = f_B.reshape(G, Lb, H).astype(bf16)

    # Scores computed ONCE; alpha weights come from a cheap XLU transpose of e
    # (tiny (La,Lb) per-batch transpose) instead of a second MXU einsum pass.
    e = jnp.einsum("gah,gbh->gab", fAb, fBb, preferred_element_type=f32)  # (G,La,Lb)
    e_t = jnp.swapaxes(e, 1, 2)                                           # (G,Lb,La)

    beta = jnp.einsum("gab,gbe->gae", softmax_last(e).astype(bf16), B,
                      preferred_element_type=f32)                         # (G,La,E)
    alpha = jnp.einsum("gba,gae->gbe", softmax_last(e_t).astype(bf16), A,
                       preferred_element_type=f32)                        # (G,Lb,E)

    # ---- Compare: g(cat([A, beta])) via split first-layer weights ----
    # (E is lane-padded to >= 128, the regime where the split-weight form is
    #  the right call; no lane concat needed.)
    wg1a, wg1b, wg2 = wg_ref[:E], wg_ref[E:2 * E], wg_ref[2 * E:]
    bg1, bg2 = bg_ref[0:1], bg_ref[1:2]
    hA = jnp.maximum(dot(A2, wg1a) + dot(beta.reshape(G * La, E), wg1b) + bg1, 0.0)
    hB = jnp.maximum(dot(B2, wg1a) + dot(alpha.reshape(G * Lb, E), wg1b) + bg1, 0.0)
    V_A = jnp.maximum(dot(hA, wg2) + bg2, 0.0)          # (G*La, H)
    V_B = jnp.maximum(dot(hB, wg2) + bg2, 0.0)          # (G*Lb, H)

    # ---- Aggregate: sum-pool, h(cat([vA, vB])) via split weights, classify ----
    vA = jnp.sum(V_A.reshape(G, La, H), axis=1)         # (G, H)
    vB = jnp.sum(V_B.reshape(G, Lb, H), axis=1)         # (G, H)
    wh1a, wh1b, wh2 = wh_ref[:H], wh_ref[H:2 * H], wh_ref[2 * H:]
    bh1, bh2 = bh_ref[0:1], bh_ref[1:2]
    h = jnp.maximum(dot(vA, wh1a) + dot(vB, wh1b) + bh1, 0.0)
    h = jnp.maximum(dot(h, wh2) + bh2, 0.0)             # (G, H)
    y = dot(h, wo_ref[...]) + bo_ref[...]               # (G, OUT_PAD) lane-dense
    out_ref[0] = y.astype(out_ref.dtype)


def _round_up(x, m):
    return (x + m - 1) // m * m


def _pad2(w, rows, cols):
    r, c = w.shape
    return jnp.pad(w, ((0, rows - r), (0, cols - c)))


def decomposable_attention_forward(premises, hypotheses, params, *, block_batch=64):
    bf16, f32 = jnp.bfloat16, jnp.float32
    E = params["embedding"].shape[1]
    H = params["wf2"].shape[0]
    num_out = params["wo"].shape[1]
    E_pad, H_pad = _round_up(E, LANE), _round_up(H, LANE)
    OUT_PAD = _round_up(num_out, LANE)

    # Embedding gather: plain-JAX glue (padded to lane-dense E).
    # TODO(synk): fuse this gather in-kernel (VMEM table + jnp.take / DMA gather).
    emb = _pad2(params["embedding"], params["embedding"].shape[0], E_pad).astype(bf16)
    A = emb[premises]      # (batch, La, E_pad)
    B = emb[hypotheses]    # (batch, Lb, E_pad)
    batch, La, _ = A.shape
    Lb = B.shape[1]

    # Batch tile.  Keep num_tiles >= 2 so both v7x TensorCores get work via the
    # parallel grid axis.  At real sizes grow `block_batch` until the flattened
    # MLP M dim G*(La+Lb) >= 256, bounded by the per-generation VMEM budget
    # (v7x: 64 MiB physical / 32 MiB default scoped; re-derive, don't copy v6e).
    G = max(1, min(block_batch, pl.cdiv(batch, 2)))
    num_tiles = pl.cdiv(batch, G)
    pad = num_tiles * G - batch
    if pad:
        A = jnp.pad(A, ((0, pad), (0, 0), (0, 0)))
        B = jnp.pad(B, ((0, pad), (0, 0), (0, 0)))

    # Pack per-MLP weights (bf16, lane-padded) and biases (f32 row-stacks).
    # Row ordering matches PyTorch's cat([A, beta], -1) / cat([vA, vB], -1).
    wg1a, wg1b = params["wg1"][:E], params["wg1"][E:]
    wh1a, wh1b = params["wh1"][:H], params["wh1"][H:]
    Wf = jnp.concatenate([_pad2(params["wf1"], E_pad, H_pad),
                          _pad2(params["wf2"], H_pad, H_pad)], axis=0).astype(bf16)
    Bf = jnp.concatenate([_pad2(params["bf1"], 1, H_pad),
                          _pad2(params["bf2"], 1, H_pad)], axis=0).astype(f32)
    Wg = jnp.concatenate([_pad2(wg1a, E_pad, H_pad), _pad2(wg1b, E_pad, H_pad),
                          _pad2(params["wg2"], H_pad, H_pad)], axis=0).astype(bf16)
    Bg = jnp.concatenate([_pad2(params["bg1"], 1, H_pad),
                          _pad2(params["bg2"], 1, H_pad)], axis=0).astype(f32)
    Wh = jnp.concatenate([_pad2(wh1a, H_pad, H_pad), _pad2(wh1b, H_pad, H_pad),
                          _pad2(params["wh2"], H_pad, H_pad)], axis=0).astype(bf16)
    Bh = jnp.concatenate([_pad2(params["bh1"], 1, H_pad),
                          _pad2(params["bh2"], 1, H_pad)], axis=0).astype(f32)
    Wo = _pad2(params["wo"], H_pad, OUT_PAD).astype(bf16)
    Bo = _pad2(params["bo"], 1, OUT_PAD).astype(f32)
    weights = (Wf, Bf, Wg, Bg, Wh, Bh, Wo, Bo)

    def w_spec(w):
        return pl.BlockSpec(w.shape, lambda b: (0, 0))

    # Advisory cost estimate (whole call) so XLA schedules the gather/pad well.
    tokens = num_tiles * G * (La + Lb)
    flops = 2 * tokens * (E_pad * H_pad + H_pad * H_pad)            # Attend.f
    flops += 2 * num_tiles * G * La * Lb * H_pad                    # scores e
    flops += 2 * 2 * num_tiles * G * La * Lb * E_pad                # beta + alpha
    flops += 2 * tokens * (2 * E_pad * H_pad + H_pad * H_pad)       # Compare.g
    flops += 2 * num_tiles * G * (3 * H_pad * H_pad + H_pad * OUT_PAD)  # Aggregate
    transcendentals = 2 * num_tiles * G * La * Lb                   # softmax exps
    bytes_accessed = (A.size + B.size) * 2 + sum(int(w.size) * w.dtype.itemsize
                                                 for w in weights)
    bytes_accessed += num_tiles * G * OUT_PAD * 4
    cost = pl.CostEstimate(flops=int(flops), transcendentals=int(transcendentals),
                           bytes_accessed=int(bytes_accessed))

    out = pl.pallas_call(
        decomposable_attention_kernel,
        out_shape=jax.ShapeDtypeStruct((num_tiles, G, OUT_PAD), jnp.float32),
        grid=(num_tiles,),
        in_specs=[pl.BlockSpec((G, La, E_pad), lambda b: (b, 0, 0)),
                  pl.BlockSpec((G, Lb, E_pad), lambda b: (b, 0, 0))]
                 + [w_spec(w) for w in weights],
        out_specs=pl.BlockSpec((1, G, OUT_PAD), lambda b: (b, 0, 0)),
        compiler_params=pltpu.CompilerParams(
            dimension_semantics=("parallel",),
            # Explicit scoped-VMEM limit: above v5e's 16 MiB / the 32 MiB v6e-v7x
            # defaults, but under v7x's 64 MiB physical capacity.
            vmem_limit_bytes=48 * 1024 * 1024),
        cost_estimate=cost,
    )(A, B, *weights)
    return out.reshape(num_tiles * G, OUT_PAD)[:batch, :num_out]


def init_params(key, vocab_size, embedding_dim, hidden_dim, num_outputs=3):
    """Deterministic synthetic params (PyTorch-Linear-style uniform init)."""
    keys = jax.random.split(key, 8)

    def lin(k, fan_in, fan_out):
        kw, kb = jax.random.split(k)
        bound = 1.0 / jnp.sqrt(jnp.float32(fan_in))
        w = jax.random.uniform(kw, (fan_in, fan_out), jnp.float32, -bound, bound)
        b = jax.random.uniform(kb, (1, fan_out), jnp.float32, -bound, bound)
        return w, b

    p = {}
    p["embedding"] = jax.random.normal(keys[0], (vocab_size, embedding_dim), jnp.float32)
    # Attend.f: mlp(num_inputs_attend=E, H)
    p["wf1"], p["bf1"] = lin(keys[1], embedding_dim, hidden_dim)
    p["wf2"], p["bf2"] = lin(keys[2], hidden_dim, hidden_dim)
    # Compare.g: mlp(num_inputs_compare=2E, H)
    p["wg1"], p["bg1"] = lin(keys[3], 2 * embedding_dim, hidden_dim)
    p["wg2"], p["bg2"] = lin(keys[4], hidden_dim, hidden_dim)
    # Aggregate.h: mlp(num_inputs_agg=2H, H)
    p["wh1"], p["bh1"] = lin(keys[5], 2 * hidden_dim, hidden_dim)
    p["wh2"], p["bh2"] = lin(keys[6], hidden_dim, hidden_dim)
    # Aggregate.linear: H -> 3
    p["wo"], p["bo"] = lin(keys[7], hidden_dim, num_outputs)
    return p


if __name__ == "__main__":
    key = jax.random.PRNGKey(0)
    vocab_size, embedding_dim, hidden_dim = 50, 32, 32
    batch, seq = 8, 8

    kp, kh, kw = jax.random.split(key, 3)
    premises = jax.random.randint(kp, (batch, seq), 0, vocab_size, dtype=jnp.int32)
    hypotheses = jax.random.randint(kh, (batch, seq), 0, vocab_size, dtype=jnp.int32)
    params = init_params(kw, vocab_size, embedding_dim, hidden_dim)

    # G is capped at batch//2 -> grid=(2,): both v7x TensorCores get a tile.
    y_hat = decomposable_attention_forward(premises, hypotheses, params, block_batch=64)
    jax.block_until_ready(y_hat)
    assert y_hat.shape == (batch, 3) and y_hat.dtype == jnp.float32
    assert bool(jnp.all(jnp.isfinite(y_hat)))
    print("KERNEL_OK")
</pallas_src>

<mosaic_0001>
module attributes {stable_mosaic.version = 11 : i64} {
  func.func @decomposable_attention_kernel(%arg0: i32, %arg1: memref<4x8x128xbf16, #tpu.memory_space<vmem>>, %arg2: memref<4x8x128xbf16, #tpu.memory_space<vmem>>, %arg3: memref<256x128xbf16, #tpu.memory_space<vmem>>, %arg4: memref<2x128xf32, #tpu.memory_space<vmem>>, %arg5: memref<384x128xbf16, #tpu.memory_space<vmem>>, %arg6: memref<2x128xf32, #tpu.memory_space<vmem>>, %arg7: memref<384x128xbf16, #tpu.memory_space<vmem>>, %arg8: memref<2x128xf32, #tpu.memory_space<vmem>>, %arg9: memref<128x128xbf16, #tpu.memory_space<vmem>>, %arg10: memref<1x128xf32, #tpu.memory_space<vmem>>, %arg11: memref<1x4x128xf32, #tpu.memory_space<vmem>>) attributes {dimension_semantics = [#tpu.dimension_semantics<parallel>], iteration_bounds = array<i64: 2>, scalar_prefetch = 0 : i64, scratch_operands = 0 : i64, tpu.core_type = #tpu.core_type<tc>, window_params = [{transform_indices = @transform_0, window_bounds = array<i64: 4, 8, 128>}, {transform_indices = @transform_1, window_bounds = array<i64: 4, 8, 128>}, {pipeline_mode = #tpu.pipeline_mode<synchronous>, transform_indices = @transform_2, window_bounds = array<i64: 256, 128>}, {pipeline_mode = #tpu.pipeline_mode<synchronous>, transform_indices = @transform_3, window_bounds = array<i64: 2, 128>}, {pipeline_mode = #tpu.pipeline_mode<synchronous>, transform_indices = @transform_4, window_bounds = array<i64: 384, 128>}, {pipeline_mode = #tpu.pipeline_mode<synchronous>, transform_indices = @transform_5, window_bounds = array<i64: 2, 128>}, {pipeline_mode = #tpu.pipeline_mode<synchronous>, transform_indices = @transform_6, window_bounds = array<i64: 384, 128>}, {pipeline_mode = #tpu.pipeline_mode<synchronous>, transform_indices = @transform_7, window_bounds = array<i64: 2, 128>}, {pipeline_mode = #tpu.pipeline_mode<synchronous>, transform_indices = @transform_8, window_bounds = array<i64: 128, 128>}, {pipeline_mode = #tpu.pipeline_mode<synchronous>, transform_indices = @transform_9, window_bounds = array<i64: 1, 128>}, {transform_indices = @transform_10, window_bounds = array<i64: 1, 4, 128>}]} {
    %c0 = arith.constant 0 : index
    %c0_0 = arith.constant 0 : index
    %c0_1 = arith.constant 0 : index
    %0 = vector.load %arg1[%c0, %c0_0, %c0_1] : memref<4x8x128xbf16, #tpu.memory_space<vmem>>, vector<4x8x128xbf16>
    %c0_2 = arith.constant 0 : index
    %c0_3 = arith.constant 0 : index
    %c0_4 = arith.constant 0 : index
    %1 = vector.load %arg2[%c0_2, %c0_3, %c0_4] : memref<4x8x128xbf16, #tpu.memory_space<vmem>>, vector<4x8x128xbf16>
    %2 = vector.shape_cast %0 : vector<4x8x128xbf16> to vector<32x128xbf16>
    %3 = vector.shape_cast %1 : vector<4x8x128xbf16> to vector<32x128xbf16>
    %c0_5 = arith.constant 0 : index
    %c0_6 = arith.constant 0 : index
    %4 = vector.load %arg3[%c0_5, %c0_6] : memref<256x128xbf16, #tpu.memory_space<vmem>>, vector<128x128xbf16>
    %c128 = arith.constant 128 : index
    %c0_7 = arith.constant 0 : index
    %5 = vector.load %arg3[%c128, %c0_7] : memref<256x128xbf16, #tpu.memory_space<vmem>>, vector<128x128xbf16>
    %c0_8 = arith.constant 0 : index
    %c0_9 = arith.constant 0 : index
    %6 = vector.load %arg4[%c0_8, %c0_9] : memref<2x128xf32, #tpu.memory_space<vmem>>, vector<1x128xf32>
    %c1 = arith.constant 1 : index
    %c0_10 = arith.constant 0 : index
    %7 = vector.load %arg4[%c1, %c0_10] : memref<2x128xf32, #tpu.memory_space<vmem>>, vector<1x128xf32>
    %cst = arith.constant dense<0.000000e+00> : vector<32x128xf32>
    %8 = tpu.matmul %2, %4, %cst {dimension_numbers = #tpu.dot_dimension_numbers<[1], [0], [0], [1], [0, 0, 1, 1], [], []>} : vector<32x128xbf16>, vector<128x128xbf16>, vector<32x128xf32> -> vector<32x128xf32>
    %9 = vector.broadcast %6 : vector<1x128xf32> to vector<32x128xf32>
    %10 = arith.addf %8, %9 : vector<32x128xf32>
    %cst_11 = arith.constant 0.000000e+00 : f32
    %11 = vector.broadcast %cst_11 : f32 to vector<32x128xf32>
    %12 = arith.maximumf %10, %11 : vector<32x128xf32>
    %13 = arith.truncf %12 : vector<32x128xf32> to vector<32x128xbf16>
    %cst_12 = arith.constant dense<0.000000e+00> : vector<32x128xf32>
    %14 = tpu.matmul %13, %5, %cst_12 {dimension_numbers = #tpu.dot_dimension_numbers<[1], [0], [0], [1], [0, 0, 1, 1], [], []>} : vector<32x128xbf16>, vector<128x128xbf16>, vector<32x128xf32> -> vector<32x128xf32>
    %15 = vector.broadcast %7 : vector<1x128xf32> to vector<32x128xf32>
    %16 = arith.addf %14, %15 : vector<32x128xf32>
    %cst_13 = arith.constant 0.000000e+00 : f32
    %17 = vector.broadcast %cst_13 : f32 to vector<32x128xf32>
    %18 = arith.maximumf %16, %17 : vector<32x128xf32>
    %cst_14 = arith.constant dense<0.000000e+00> : vector<32x128xf32>
    %19 = tpu.matmul %3, %4, %cst_14 {dimension_numbers = #tpu.dot_dimension_numbers<[1], [0], [0], [1], [0, 0, 1, 1], [], []>} : vector<32x128xbf16>, vector<128x128xbf16>, vector<32x128xf32> -> vector<32x128xf32>
    %20 = vector.broadcast %6 : vector<1x128xf32> to vector<32x128xf32>
    %21 = arith.addf %19, %20 : vector<32x128xf32>
    %cst_15 = arith.constant 0.000000e+00 : f32
    %22 = vector.broadcast %cst_15 : f32 to vector<32x128xf32>
    %23 = arith.maximumf %21, %22 : vector<32x128xf32>
    %24 = arith.truncf %23 : vector<32x128xf32> to vector<32x128xbf16>
    %cst_16 = arith.constant dense<0.000000e+00> : vector<32x128xf32>
    %25 = tpu.matmul %24, %5, %cst_16 {dimension_numbers = #tpu.dot_dimension_numbers<[1], [0], [0], [1], [0, 0, 1, 1], [], []>} : vector<32x128xbf16>, vector<128x128xbf16>, vector<32x128xf32> -> vector<32x128xf32>
    %26 = vector.broadcast %7 : vector<1x128xf32> to vector<32x128xf32>
    %27 = arith.addf %25, %26 : vector<32x128xf32>
    %cst_17 = arith.constant 0.000000e+00 : f32
    %28 = vector.broadcast %cst_17 : f32 to vector<32x128xf32>
    %29 = arith.maximumf %27, %28 : vector<32x128xf32>
    %30 = vector.shape_cast %18 : vector<32x128xf32> to vector<4x8x128xf32>
    %31 = arith.truncf %30 : vector<4x8x128xf32> to vector<4x8x128xbf16>
    %32 = vector.shape_cast %29 : vector<32x128xf32> to vector<4x8x128xf32>
    %33 = arith.truncf %32 : vector<4x8x128xf32> to vector<4x8x128xbf16>
    "tpu.trace_start"() <{level = 10 : i32, message = "gah,gbh->gab"}> : () -> ()
    %cst_18 = arith.constant dense<0.000000e+00> : vector<4x8x8xf32>
    %34 = tpu.matmul %31, %33, %cst_18 {dimension_numbers = #tpu.dot_dimension_numbers<[2], [2], [1], [1], [0, 0, 0, 1, 1, 1], [0], [0]>} : vector<4x8x128xbf16>, vector<4x8x128xbf16>, vector<4x8x8xf32> -> vector<4x8x8xf32>
    "tpu.trace_stop"() : () -> ()
    %35 = tpu.transpose %34, [0, 2, 1] : vector<4x8x8xf32> -> vector<4x8x8xf32>
    %cst_19 = arith.constant dense<0xFF800000> : vector<4x8xf32>
    %36 = vector.multi_reduction <maximumf>, %34, %cst_19 [2] : vector<4x8x8xf32> to vector<4x8xf32>
    %37 = vector.shape_cast %36 : vector<4x8xf32> to vector<4x8x1xf32>
    %38 = vector.broadcast %37 : vector<4x8x1xf32> to vector<4x8x8xf32>
    %39 = arith.subf %34, %38 : vector<4x8x8xf32>
    %40 = math.exp %39 : vector<4x8x8xf32>
    %cst_20 = arith.constant dense<0.000000e+00> : vector<4x8xf32>
    %41 = vector.multi_reduction <add>, %40, %cst_20 [2] : vector<4x8x8xf32> to vector<4x8xf32>
    %42 = vector.shape_cast %41 : vector<4x8xf32> to vector<4x8x1xf32>
    %43 = tpu.reciprocal %42 {approx = true} : vector<4x8x1xf32> -> vector<4x8x1xf32>
    %44 = vector.broadcast %43 : vector<4x8x1xf32> to vector<4x8x8xf32>
    %45 = arith.mulf %40, %44 : vector<4x8x8xf32>
    %46 = arith.truncf %45 : vector<4x8x8xf32> to vector<4x8x8xbf16>
    "tpu.trace_start"() <{level = 10 : i32, message = "gab,gbe->gae"}> : () -> ()
    %cst_21 = arith.constant dense<0.000000e+00> : vector<4x8x128xf32>
    %47 = tpu.matmul %46, %1, %cst_21 {dimension_numbers = #tpu.dot_dimension_numbers<[2], [1], [1], [2], [0, 0, 0, 1, 1, 2], [0], [0]>} : vector<4x8x8xbf16>, vector<4x8x128xbf16>, vector<4x8x128xf32> -> vector<4x8x128xf32>
    "tpu.trace_stop"() : () -> ()
    %cst_22 = arith.constant dense<0xFF800000> : vector<4x8xf32>
    %48 = vector.multi_reduction <maximumf>, %35, %cst_22 [2] : vector<4x8x8xf32> to vector<4x8xf32>
    %49 = vector.shape_cast %48 : vector<4x8xf32> to vector<4x8x1xf32>
    %50 = vector.broadcast %49 : vector<4x8x1xf32> to vector<4x8x8xf32>
    %51 = arith.subf %35, %50 : vector<4x8x8xf32>
    %52 = math.exp %51 : vector<4x8x8xf32>
    %cst_23 = arith.constant dense<0.000000e+00> : vector<4x8xf32>
    %53 = vector.multi_reduction <add>, %52, %cst_23 [2] : vector<4x8x8xf32> to vector<4x8xf32>
    %54 = vector.shape_cast %53 : vector<4x8xf32> to vector<4x8x1xf32>
    %55 = tpu.reciprocal %54 {approx = true} : vector<4x8x1xf32> -> vector<4x8x1xf32>
    %56 = vector.broadcast %55 : vector<4x8x1xf32> to vector<4x8x8xf32>
    %57 = arith.mulf %52, %56 : vector<4x8x8xf32>
    %58 = arith.truncf %57 : vector<4x8x8xf32> to vector<4x8x8xbf16>
    "tpu.trace_start"() <{level = 10 : i32, message = "gba,gae->gbe"}> : () -> ()
    %cst_24 = arith.constant dense<0.000000e+00> : vector<4x8x128xf32>
    %59 = tpu.matmul %58, %0, %cst_24 {dimension_numbers = #tpu.dot_dimension_numbers<[2], [1], [1], [2], [0, 0, 0, 1, 1, 2], [0], [0]>} : vector<4x8x8xbf16>, vector<4x8x128xbf16>, vector<4x8x128xf32> -> vector<4x8x128xf32>
    "tpu.trace_stop"() : () -> ()
    %c0_25 = arith.constant 0 : index
    %c0_26 = arith.constant 0 : index
    %60 = vector.load %arg5[%c0_25, %c0_26] : memref<384x128xbf16, #tpu.memory_space<vmem>>, vector<128x128xbf16>
    %c128_27 = arith.constant 128 : index
    %c0_28 = arith.constant 0 : index
    %61 = vector.load %arg5[%c128_27, %c0_28] : memref<384x128xbf16, #tpu.memory_space<vmem>>, vector<128x128xbf16>
    %c256 = arith.constant 256 : index
    %c0_29 = arith.constant 0 : index
    %62 = vector.load %arg5[%c256, %c0_29] : memref<384x128xbf16, #tpu.memory_space<vmem>>, vector<128x128xbf16>
    %c0_30 = arith.constant 0 : index
    %c0_31 = arith.constant 0 : index
    %63 = vector.load %arg6[%c0_30, %c0_31] : memref<2x128xf32, #tpu.memory_space<vmem>>, vector<1x128xf32>
    %c1_32 = arith.constant 1 : index
    %c0_33 = arith.constant 0 : index
    %64 = vector.load %arg6[%c1_32, %c0_33] : memref<2x128xf32, #tpu.memory_space<vmem>>, vector<1x128xf32>
    %cst_34 = arith.constant dense<0.000000e+00> : vector<32x128xf32>
    %65 = tpu.matmul %2, %60, %cst_34 {dimension_numbers = #tpu.dot_dimension_numbers<[1], [0], [0], [1], [0, 0, 1, 1], [], []>} : vector<32x128xbf16>, vector<128x128xbf16>, vector<32x128xf32> -> vector<32x128xf32>
    %66 = vector.shape_cast %47 : vector<4x8x128xf32> to vector<32x128xf32>
    %67 = arith.truncf %66 : vector<32x128xf32> to vector<32x128xbf16>
    %cst_35 = arith.constant dense<0.000000e+00> : vector<32x128xf32>
    %68 = tpu.matmul %67, %61, %cst_35 {dimension_numbers = #tpu.dot_dimension_numbers<[1], [0], [0], [1], [0, 0, 1, 1], [], []>} : vector<32x128xbf16>, vector<128x128xbf16>, vector<32x128xf32> -> vector<32x128xf32>
    %69 = arith.addf %65, %68 : vector<32x128xf32>
    %70 = vector.broadcast %63 : vector<1x128xf32> to vector<32x128xf32>
    %71 = arith.addf %69, %70 : vector<32x128xf32>
    %cst_36 = arith.constant 0.000000e+00 : f32
    %72 = vector.broadcast %cst_36 : f32 to vector<32x128xf32>
    %73 = arith.maximumf %71, %72 : vector<32x128xf32>
    %cst_37 = arith.constant dense<0.000000e+00> : vector<32x128xf32>
    %74 = tpu.matmul %3, %60, %cst_37 {dimension_numbers = #tpu.dot_dimension_numbers<[1], [0], [0], [1], [0, 0, 1, 1], [], []>} : vector<32x128xbf16>, vector<128x128xbf16>, vector<32x128xf32> -> vector<32x128xf32>
    %75 = vector.shape_cast %59 : vector<4x8x128xf32> to vector<32x128xf32>
    %76 = arith.truncf %75 : vector<32x128xf32> to vector<32x128xbf16>
    %cst_38 = arith.constant dense<0.000000e+00> : vector<32x128xf32>
    %77 = tpu.matmul %76, %61, %cst_38 {dimension_numbers = #tpu.dot_dimension_numbers<[1], [0], [0], [1], [0, 0, 1, 1], [], []>} : vector<32x128xbf16>, vector<128x128xbf16>, vector<32x128xf32> -> vector<32x128xf32>
    %78 = arith.addf %74, %77 : vector<32x128xf32>
    %79 = vector.broadcast %63 : vector<1x128xf32> to vector<32x128xf32>
    %80 = arith.addf %78, %79 : vector<32x128xf32>
    %cst_39 = arith.constant 0.000000e+00 : f32
    %81 = vector.broadcast %cst_39 : f32 to vector<32x128xf32>
    %82 = arith.maximumf %80, %81 : vector<32x128xf32>
    %83 = arith.truncf %73 : vector<32x128xf32> to vector<32x128xbf16>
    %cst_40 = arith.constant dense<0.000000e+00> : vector<32x128xf32>
    %84 = tpu.matmul %83, %62, %cst_40 {dimension_numbers = #tpu.dot_dimension_numbers<[1], [0], [0], [1], [0, 0, 1, 1], [], []>} : vector<32x128xbf16>, vector<128x128xbf16>, vector<32x128xf32> -> vector<32x128xf32>
    %85 = vector.broadcast %64 : vector<1x128xf32> to vector<32x128xf32>
    %86 = arith.addf %84, %85 : vector<32x128xf32>
    %cst_41 = arith.constant 0.000000e+00 : f32
    %87 = vector.broadcast %cst_41 : f32 to vector<32x128xf32>
    %88 = arith.maximumf %86, %87 : vector<32x128xf32>
    %89 = arith.truncf %82 : vector<32x128xf32> to vector<32x128xbf16>
    %cst_42 = arith.constant dense<0.000000e+00> : vector<32x128xf32>
    %90 = tpu.matmul %89, %62, %cst_42 {dimension_numbers = #tpu.dot_dimension_numbers<[1], [0], [0], [1], [0, 0, 1, 1], [], []>} : vector<32x128xbf16>, vector<128x128xbf16>, vector<32x128xf32> -> vector<32x128xf32>
    %91 = vector.broadcast %64 : vector<1x128xf32> to vector<32x128xf32>
    %92 = arith.addf %90, %91 : vector<32x128xf32>
    %cst_43 = arith.constant 0.000000e+00 : f32
    %93 = vector.broadcast %cst_43 : f32 to vector<32x128xf32>
    %94 = arith.maximumf %92, %93 : vector<32x128xf32>
    %95 = vector.shape_cast %88 : vector<32x128xf32> to vector<4x8x128xf32>
    %cst_44 = arith.constant dense<0.000000e+00> : vector<4x128xf32>
    %96 = vector.multi_reduction <add>, %95, %cst_44 [1] : vector<4x8x128xf32> to vector<4x128xf32>
    %97 = vector.shape_cast %94 : vector<32x128xf32> to vector<4x8x128xf32>
    %cst_45 = arith.constant dense<0.000000e+00> : vector<4x128xf32>
    %98 = vector.multi_reduction <add>, %97, %cst_45 [1] : vector<4x8x128xf32> to vector<4x128xf32>
    %c0_46 = arith.constant 0 : index
    %c0_47 = arith.constant 0 : index
    %99 = vector.load %arg7[%c0_46, %c0_47] : memref<384x128xbf16, #tpu.memory_space<vmem>>, vector<128x128xbf16>
    %c128_48 = arith.constant 128 : index
    %c0_49 = arith.constant 0 : index
    %100 = vector.load %arg7[%c128_48, %c0_49] : memref<384x128xbf16, #tpu.memory_space<vmem>>, vector<128x128xbf16>
    %c256_50 = arith.constant 256 : index
    %c0_51 = arith.constant 0 : index
    %101 = vector.load %arg7[%c256_50, %c0_51] : memref<384x128xbf16, #tpu.memory_space<vmem>>, vector<128x128xbf16>
    %c0_52 = arith.constant 0 : index
    %c0_53 = arith.constant 0 : index
    %102 = vector.load %arg8[%c0_52, %c0_53] : memref<2x128xf32, #tpu.memory_space<vmem>>, vector<1x128xf32>
    %c1_54 = arith.constant 1 : index
    %c0_55 = arith.constant 0 : index
    %103 = vector.load %arg8[%c1_54, %c0_55] : memref<2x128xf32, #tpu.memory_space<vmem>>, vector<1x128xf32>
    %104 = arith.truncf %96 : vector<4x128xf32> to vector<4x128xbf16>
    %cst_56 = arith.constant dense<0.000000e+00> : vector<4x128xf32>
    %105 = tpu.matmul %104, %99, %cst_56 {dimension_numbers = #tpu.dot_dimension_numbers<[1], [0], [0], [1], [0, 0, 1, 1], [], []>} : vector<4x128xbf16>, vector<128x128xbf16>, vector<4x128xf32> -> vector<4x128xf32>
    %106 = arith.truncf %98 : vector<4x128xf32> to vector<4x128xbf16>
    %cst_57 = arith.constant dense<0.000000e+00> : vector<4x128xf32>
    %107 = tpu.matmul %106, %100, %cst_57 {dimension_numbers = #tpu.dot_dimension_numbers<[1], [0], [0], [1], [0, 0, 1, 1], [], []>} : vector<4x128xbf16>, vector<128x128xbf16>, vector<4x128xf32> -> vector<4x128xf32>
    %108 = arith.addf %105, %107 : vector<4x128xf32>
    %109 = vector.broadcast %102 : vector<1x128xf32> to vector<4x128xf32>
    %110 = arith.addf %108, %109 : vector<4x128xf32>
    %cst_58 = arith.constant 0.000000e+00 : f32
    %111 = vector.broadcast %cst_58 : f32 to vector<4x128xf32>
    %112 = arith.maximumf %110, %111 : vector<4x128xf32>
    %113 = arith.truncf %112 : vector<4x128xf32> to vector<4x128xbf16>
    %cst_59 = arith.constant dense<0.000000e+00> : vector<4x128xf32>
    %114 = tpu.matmul %113, %101, %cst_59 {dimension_numbers = #tpu.dot_dimension_numbers<[1], [0], [0], [1], [0, 0, 1, 1], [], []>} : vector<4x128xbf16>, vector<128x128xbf16>, vector<4x128xf32> -> vector<4x128xf32>
    %115 = vector.broadcast %103 : vector<1x128xf32> to vector<4x128xf32>
    %116 = arith.addf %114, %115 : vector<4x128xf32>
    %cst_60 = arith.constant 0.000000e+00 : f32
    %117 = vector.broadcast %cst_60 : f32 to vector<4x128xf32>
    %118 = arith.maximumf %116, %117 : vector<4x128xf32>
    %c0_61 = arith.constant 0 : index
    %c0_62 = arith.constant 0 : index
    %119 = vector.load %arg9[%c0_61, %c0_62] : memref<128x128xbf16, #tpu.memory_space<vmem>>, vector<128x128xbf16>
    %120 = arith.truncf %118 : vector<4x128xf32> to vector<4x128xbf16>
    %cst_63 = arith.constant dense<0.000000e+00> : vector<4x128xf32>
    %121 = tpu.matmul %120, %119, %cst_63 {dimension_numbers = #tpu.dot_dimension_numbers<[1], [0], [0], [1], [0, 0, 1, 1], [], []>} : vector<4x128xbf16>, vector<128x128xbf16>, vector<4x128xf32> -> vector<4x128xf32>
    %c0_64 = arith.constant 0 : index
    %c0_65 = arith.constant 0 : index
    %122 = vector.load %arg10[%c0_64, %c0_65] : memref<1x128xf32, #tpu.memory_space<vmem>>, vector<1x128xf32>
    %123 = vector.broadcast %122 : vector<1x128xf32> to vector<4x128xf32>
    %124 = arith.addf %121, %123 : vector<4x128xf32>
    %c0_66 = arith.constant 0 : index
    %c0_67 = arith.constant 0 : index
    %c0_68 = arith.constant 0 : index
    %125 = vector.load %arg11[%c0_66, %c0_67, %c0_68] : memref<1x4x128xf32, #tpu.memory_space<vmem>>, vector<1x4x128xf32>
    %126 = vector.shape_cast %125 : vector<1x4x128xf32> to vector<4x128xf32>
    %127 = vector.shape_cast %124 : vector<4x128xf32> to vector<1x4x128xf32>
    tpu.vector_store %arg11[%c0_66, %c0_67, %c0_68], %127 {strides = array<i32>} : memref<1x4x128xf32, #tpu.memory_space<vmem>>, vector<1x4x128xf32>,
    return
  }
  func.func @transform_0(%arg0: i32) -> (i32, i32, i32) {
    %c0_i32 = arith.constant 0 : i32
    %c0_i32_0 = arith.constant 0 : i32
    %c0_i32_1 = arith.constant 0 : i32
    return %arg0, %c0_i32, %c0_i32_0 : i32, i32, i32
  }
  func.func @transform_1(%arg0: i32) -> (i32, i32, i32) {
    %c0_i32 = arith.constant 0 : i32
    %c0_i32_0 = arith.constant 0 : i32
    %c0_i32_1 = arith.constant 0 : i32
    return %arg0, %c0_i32, %c0_i32_0 : i32, i32, i32
  }
  func.func @transform_2(%arg0: i32) -> (i32, i32) {
    %c0_i32 = arith.constant 0 : i32
    %c0_i32_0 = arith.constant 0 : i32
    %c0_i32_1 = arith.constant 0 : i32
    return %c0_i32, %c0_i32_0 : i32, i32
  }
  func.func @transform_3(%arg0: i32) -> (i32, i32) {
    %c0_i32 = arith.constant 0 : i32
    %c0_i32_0 = arith.constant 0 : i32
    %c0_i32_1 = arith.constant 0 : i32
    return %c0_i32, %c0_i32_0 : i32, i32
  }
  func.func @transform_4(%arg0: i32) -> (i32, i32) {
    %c0_i32 = arith.constant 0 : i32
    %c0_i32_0 = arith.constant 0 : i32
    %c0_i32_1 = arith.constant 0 : i32
    return %c0_i32, %c0_i32_0 : i32, i32
  }
  func.func @transform_5(%arg0: i32) -> (i32, i32) {
    %c0_i32 = arith.constant 0 : i32
    %c0_i32_0 = arith.constant 0 : i32
    %c0_i32_1 = arith.constant 0 : i32
    return %c0_i32, %c0_i32_0 : i32, i32
  }
  func.func @transform_6(%arg0: i32) -> (i32, i32) {
    %c0_i32 = arith.constant 0 : i32
    %c0_i32_0 = arith.constant 0 : i32
    %c0_i32_1 = arith.constant 0 : i32
    return %c0_i32, %c0_i32_0 : i32, i32
  }
  func.func @transform_7(%arg0: i32) -> (i32, i32) {
    %c0_i32 = arith.constant 0 : i32
    %c0_i32_0 = arith.constant 0 : i32
    %c0_i32_1 = arith.constant 0 : i32
    return %c0_i32, %c0_i32_0 : i32, i32
  }
  func.func @transform_8(%arg0: i32) -> (i32, i32) {
    %c0_i32 = arith.constant 0 : i32
    %c0_i32_0 = arith.constant 0 : i32
    %c0_i32_1 = arith.constant 0 : i32
    return %c0_i32, %c0_i32_0 : i32, i32
  }
  func.func @transform_9(%arg0: i32) -> (i32, i32) {
    %c0_i32 = arith.constant 0 : i32
    %c0_i32_0 = arith.constant 0 : i32
    %c0_i32_1 = arith.constant 0 : i32
    return %c0_i32, %c0_i32_0 : i32, i32
  }
  func.func @transform_10(%arg0: i32) -> (i32, i32, i32) {
    %c0_i32 = arith.constant 0 : i32
    %c0_i32_0 = arith.constant 0 : i32
    %c0_i32_1 = arith.constant 0 : i32
    return %arg0, %c0_i32, %c0_i32_0 : i32, i32, i32
  }
}

</mosaic_0001>

<llo_original>
// kernel: tpu_custom_call.1
$region0: #{tpu_custom_call.1}
  #allocation0 [shape = 'u32[]', space=smem, size = 0x4, offset = 0x4, fixed_abs, tag = 'smem constant byte address 0x4 - core index']
  #allocation1 [shape = 'u32[144,128]{1,0:T(1,128)}', space=vmem, size = 0x12000, scoped, tag = 'internal scratch']
  %s0 = inlined_call_operand.hbm [shape: bf16[8,8,128], index: 0, kind: input, shape index: {}]
  %s1 = inlined_call_operand.hbm [shape: bf16[8,8,128], index: 1, kind: input, shape index: {}]
  %s2 = inlined_call_operand.hbm [shape: bf16[256,128], index: 2, kind: input, shape index: {}]
  %s3 = inlined_call_operand.vmem [shape: f32[2,128], index: 3, kind: input, shape index: {}]
  %s4 = inlined_call_operand.hbm [shape: bf16[384,128], index: 4, kind: input, shape index: {}]
  %s5 = inlined_call_operand.vmem [shape: f32[2,128], index: 5, kind: input, shape index: {}]
  %s6 = inlined_call_operand.hbm [shape: bf16[384,128], index: 6, kind: input, shape index: {}]
  %s7 = inlined_call_operand.vmem [shape: f32[2,128], index: 7, kind: input, shape index: {}]
  %s8 = inlined_call_operand.hbm [shape: bf16[128,128], index: 8, kind: input, shape index: {}]
  %s9 = inlined_call_operand.vmem [shape: f32[1,128], index: 9, kind: input, shape index: {}]
  %s10 = inlined_call_operand.hbm [shape: f32[2,4,128], index: 10, kind: output, shape index: {}]
  %s11 = sld [smem:[#allocation0]]
  $region97: #{tpu_custom_call.1} parent=0
    _
  %s13 = ssub.s32 1, %s11
  %s14 = scalar_select 0, %s13, %s11
  $region1: #{tpu_custom_call.1} parent=0
    #allocation2 [shape = 'u8[16384]{0}', space=vmem, size = 0x4000, scoped, tag = 'input window, operand 0']
    #allocation3 [shape = 's32[2]{0}', space=sflag, size = 0x8, scoped, tag = 'scoped memory for tpu_custom_call.1']
    #allocation4 [shape = 's32[2]{0}', space=sflag, size = 0x8, scoped, tag = 'scoped memory for tpu_custom_call.1']
    #allocation5 [shape = 'u8[16384]{0}', space=vmem, size = 0x4000, scoped, tag = 'input window, operand 1']
    #allocation6 [shape = 's32[2]{0}', space=sflag, size = 0x8, scoped, tag = 'scoped memory for tpu_custom_call.1']
    #allocation7 [shape = 'u8[65536]{0}', space=vmem, size = 0x10000, scoped, tag = 'input window, operand 2, single buffered']
    #allocation8 [shape = 'u8[98304]{0}', space=vmem, size = 0x18000, scoped, tag = 'input window, operand 4, single buffered']
    #allocation9 [shape = 's32[1]{0}', space=sflag, size = 0x4, scoped, tag = 'scoped memory for tpu_custom_call.1']
    #allocation10 [shape = 'u8[98304]{0}', space=vmem, size = 0x18000, scoped, tag = 'input window, operand 6, single buffered']
    #allocation11 [shape = 'u8[32768]{0}', space=vmem, size = 0x8000, scoped, tag = 'input window, operand 8, single buffered']
    #allocation12 [shape = 's32[1]{0}', space=sflag, size = 0x4, scoped, tag = 'scoped memory for tpu_custom_call.1']
    #allocation13 [shape = 'u8[4096]{0}', space=vmem, size = 0x1000, scoped, tag = 'output window, operand 0']
    %15 = vsyncpa [#allocation3], 0
    %s16 = scalar_lea.sflag [#allocation3], 1
    %17 = vsyncpa %s16, 0
    %18 = vsyncpa [#allocation6], 0
    %s19 = scalar_lea.sflag [#allocation6], 1
    %20 = vsyncpa %s19, 0
    %21 = vsyncpa [#allocation9], 0
    %22 = vsyncpa [#allocation12], 0
    %23 = vsyncpa [#allocation4], 0
    %s24 = scalar_lea.sflag [#allocation4], 1
    %25 = vsyncpa %s24, 0
    loop: start=0, step=1, limit=4
    $region2: #{tpu_custom_call.1} parent=1 // loop_pre_header
      _
    $region3: #{tpu_custom_call.1} parent=1 // loop_header
      %s27 = sphi 0, %s31
      %p28 = scmp.ge.s32.totalorder %s27, 4
      %s37 = sphi 0, %s39
      %s40 = sphi 0, %s37
      %s41 = sphi 0, %s40
      %s57 = sphi 0, %s41
      %s63 = sphi 0, %s65
      %s66 = sphi 0, %s63
      %s67 = sphi 0, %s66
      %s83 = sphi 0, %s67
      %s87 = sphi 0, %s87
      %s89 = sphi 0, %s87
      %s90 = sphi 0, %s89
      %s104 = sphi 0, %s90
      %s108 = sphi 0, %s108
      %s110 = sphi 0, %s108
      %s111 = sphi 0, %s110
      %s125 = sphi 0, %s111
      %s129 = sphi 0, %s129
      %s131 = sphi 0, %s129
      %s132 = sphi 0, %s131
      %s146 = sphi 0, %s132
      %s150 = sphi 0, %s150
      %s152 = sphi 0, %s150
      %s153 = sphi 0, %s152
      %s167 = sphi 0, %s153
      %s171 = sphi 0, %s171
      %s173 = sphi 0, %s171
      %s174 = sphi 0, %s173
      %s188 = sphi 0, %s174
      %s192 = sphi 0, %s192
      %s194 = sphi 0, %s192
      %s195 = sphi 0, %s194
      %s209 = sphi 0, %s195
      %s213 = sphi 0, %s213
      %s215 = sphi 0, %s213
      %s216 = sphi 0, %s215
      %s230 = sphi 0, %s216
      %s234 = sphi 0, %s234
      %s236 = sphi 0, %s234
      %s237 = sphi 0, %s236
      %s251 = sphi 0, %s237
      %s257 = sphi 0, %s259
      %s260 = sphi 0, %s257
      %s261 = sphi 0, %s260
      %s277 = sphi 0, %s261
    $region4: #{tpu_custom_call.1} parent=1 // loop_header_branch
      %30 = sbr.rel (%p28) target = $region8
    $region5: #{tpu_custom_call.1} parent=1 // loop_body
      %s32 = ssub.s32 %s27, 1
      %s33 = ssub.s32 %s27, 2
      %s34 = sadd.s32 %s27, 1
      %s35 = ssub.s32 %s27, %s34
      %p36 = scmp.eq.s32.totalorder %s35, 0
      %s38 = sadd.s32 %s37, 1
      %s39 = scalar_select %p36, %s37, %s38
      %p42 = pneg %p36
      %p43 = scmp.eq.s32.totalorder %s27, 1
      %p44 = por %p42, %p43
      %p45 = scmp.ne.s32.totalorder %s37, %s40
      %p46 = scmp.eq.s32.totalorder %s27, 0
      %p47 = por %p45, %p46
      %p48 = scmp.ne.s32.totalorder %s37, %s40
      %p49 = scmp.eq.s32.totalorder %s32, 1
      %p50 = por %p48, %p49
      %p51 = scmp.ne.s32.totalorder %s40, %s41
      %p52 = scmp.eq.s32.totalorder %s32, 0
      %p53 = por %p51, %p52
      %p54 = scmp.ne.s32.totalorder %s40, %s41
      %p55 = scmp.eq.s32.totalorder %s33, 1
      %p56 = por %p54, %p55
      %p58 = scmp.ne.s32.totalorder %s41, %s57
      %p59 = scmp.eq.s32.totalorder %s33, 0
      %p60 = por %p58, %p59
      %s61 = ssub.s32 %s27, %s34
      %p62 = scmp.eq.s32.totalorder %s61, 0
      %s64 = sadd.s32 %s63, 1
      %s65 = scalar_select %p62, %s63, %s64
      %p68 = pneg %p62
      %p69 = scmp.eq.s32.totalorder %s27, 1
      %p70 = por %p68, %p69
      %p71 = scmp.ne.s32.totalorder %s63, %s66
      %p72 = scmp.eq.s32.totalorder %s27, 0
      %p73 = por %p71, %p72
      %p74 = scmp.ne.s32.totalorder %s63, %s66
      %p75 = scmp.eq.s32.totalorder %s32, 1
      %p76 = por %p74, %p75
      %p77 = scmp.ne.s32.totalorder %s66, %s67
      %p78 = scmp.eq.s32.totalorder %s32, 0
      %p79 = por %p77, %p78
      %p80 = scmp.ne.s32.totalorder %s66, %s67
      %p81 = scmp.eq.s32.totalorder %s33, 1
      %p82 = por %p80, %p81
      %p84 = scmp.ne.s32.totalorder %s67, %s83
      %p85 = scmp.eq.s32.totalorder %s33, 0
      %p86 = por %p84, %p85
      %s88 = sadd.s32 %s87, 1
      %p91 = scmp.eq.s32.totalorder %s27, 1
      %p92 = scmp.ne.s32.totalorder %s87, %s89
      %p93 = scmp.eq.s32.totalorder %s27, 0
      %p94 = por %p92, %p93
      %p95 = scmp.ne.s32.totalorder %s87, %s89
      %p96 = scmp.eq.s32.totalorder %s32, 1
      %p97 = por %p95, %p96
      %p98 = scmp.ne.s32.totalorder %s89, %s90
      %p99 = scmp.eq.s32.totalorder %s32, 0
      %p100 = por %p98, %p99
      %p101 = scmp.ne.s32.totalorder %s89, %s90
      %p102 = scmp.eq.s32.totalorder %s33, 1
      %p103 = por %p101, %p102
      %p105 = scmp.ne.s32.totalorder %s90, %s104
      %p106 = scmp.eq.s32.totalorder %s33, 0
      %p107 = por %p105, %p106
      %s109 = sadd.s32 %s108, 1
      %p112 = scmp.eq.s32.totalorder %s27, 1
      %p113 = scmp.ne.s32.totalorder %s108, %s110
      %p114 = scmp.eq.s32.totalorder %s27, 0
      %p115 = por %p113, %p114
      %p116 = scmp.ne.s32.totalorder %s108, %s110
      %p117 = scmp.eq.s32.totalorder %s32, 1
      %p118 = por %p116, %p117
      %p119 = scmp.ne.s32.totalorder %s110, %s111
      %p120 = scmp.eq.s32.totalorder %s32, 0
      %p121 = por %p119, %p120
      %p122 = scmp.ne.s32.totalorder %s110, %s111
      %p123 = scmp.eq.s32.totalorder %s33, 1
      %p124 = por %p122, %p123
      %p126 = scmp.ne.s32.totalorder %s111, %s125
      %p127 = scmp.eq.s32.totalorder %s33, 0
      %p128 = por %p126, %p127
      %s130 = sadd.s32 %s129, 1
      %p133 = scmp.eq.s32.totalorder %s27, 1
      %p134 = scmp.ne.s32.totalorder %s129, %s131
      %p135 = scmp.eq.s32.totalorder %s27, 0
      %p136 = por %p134, %p135
      %p137 = scmp.ne.s32.totalorder %s129, %s131
      %p138 = scmp.eq.s32.totalorder %s32, 1
      %p139 = por %p137, %p138
      %p140 = scmp.ne.s32.totalorder %s131, %s132
      %p141 = scmp.eq.s32.totalorder %s32, 0
      %p142 = por %p140, %p141
      %p143 = scmp.ne.s32.totalorder %s131, %s132
      %p144 = scmp.eq.s32.totalorder %s33, 1
      %p145 = por %p143, %p144
      %p147 = scmp.ne.s32.totalorder %s132, %s146
      %p148 = scmp.eq.s32.totalorder %s33, 0
      %p149 = por %p147, %p148
      %s151 = sadd.s32 %s150, 1
      %p154 = scmp.eq.s32.totalorder %s27, 1
      %p155 = scmp.ne.s32.totalorder %s150, %s152
      %p156 = scmp.eq.s32.totalorder %s27, 0
      %p157 = por %p155, %p156
      %p158 = scmp.ne.s32.totalorder %s150, %s152
      %p159 = scmp.eq.s32.totalorder %s32, 1
      %p160 = por %p158, %p159
      %p161 = scmp.ne.s32.totalorder %s152, %s153
      %p162 = scmp.eq.s32.totalorder %s32, 0
      %p163 = por %p161, %p162
      %p164 = scmp.ne.s32.totalorder %s152, %s153
      %p165 = scmp.eq.s32.totalorder %s33, 1
      %p166 = por %p164, %p165
      %p168 = scmp.ne.s32.totalorder %s153, %s167
      %p169 = scmp.eq.s32.totalorder %s33, 0
      %p170 = por %p168, %p169
      %s172 = sadd.s32 %s171, 1
      %p175 = scmp.eq.s32.totalorder %s27, 1
      %p176 = scmp.ne.s32.totalorder %s171, %s173
      %p177 = scmp.eq.s32.totalorder %s27, 0
      %p178 = por %p176, %p177
      %p179 = scmp.ne.s32.totalorder %s171, %s173
      %p180 = scmp.eq.s32.totalorder %s32, 1
      %p181 = por %p179, %p180
      %p182 = scmp.ne.s32.totalorder %s173, %s174
      %p183 = scmp.eq.s32.totalorder %s32, 0
      %p184 = por %p182, %p183
      %p185 = scmp.ne.s32.totalorder %s173, %s174
      %p186 = scmp.eq.s32.totalorder %s33, 1
      %p187 = por %p185, %p186
      %p189 = scmp.ne.s32.totalorder %s174, %s188
      %p190 = scmp.eq.s32.totalorder %s33, 0
      %p191 = por %p189, %p190
      %s193 = sadd.s32 %s192, 1
      %p196 = scmp.eq.s32.totalorder %s27, 1
      %p197 = scmp.ne.s32.totalorder %s192, %s194
      %p198 = scmp.eq.s32.totalorder %s27, 0
      %p199 = por %p197, %p198
      %p200 = scmp.ne.s32.totalorder %s192, %s194
      %p201 = scmp.eq.s32.totalorder %s32, 1
      %p202 = por %p200, %p201
      %p203 = scmp.ne.s32.totalorder %s194, %s195
      %p204 = scmp.eq.s32.totalorder %s32, 0
      %p205 = por %p203, %p204
      %p206 = scmp.ne.s32.totalorder %s194, %s195
      %p207 = scmp.eq.s32.totalorder %s33, 1
      %p208 = por %p206, %p207
      %p210 = scmp.ne.s32.totalorder %s195, %s209
      %p211 = scmp.eq.s32.totalorder %s33, 0
      %p212 = por %p210, %p211
      %s214 = sadd.s32 %s213, 1
      %p217 = scmp.eq.s32.totalorder %s27, 1
      %p218 = scmp.ne.s32.totalorder %s213, %s215
      %p219 = scmp.eq.s32.totalorder %s27, 0
      %p220 = por %p218, %p219
      %p221 = scmp.ne.s32.totalorder %s213, %s215
      %p222 = scmp.eq.s32.totalorder %s32, 1
      %p223 = por %p221, %p222
      %p224 = scmp.ne.s32.totalorder %s215, %s216
      %p225 = scmp.eq.s32.totalorder %s32, 0
      %p226 = por %p224, %p225
      %p227 = scmp.ne.s32.totalorder %s215, %s216
      %p228 = scmp.eq.s32.totalorder %s33, 1
      %p229 = por %p227, %p228
      %p231 = scmp.ne.s32.totalorder %s216, %s230
      %p232 = scmp.eq.s32.totalorder %s33, 0
      %p233 = por %p231, %p232
      %s235 = sadd.s32 %s234, 1
      %p238 = scmp.eq.s32.totalorder %s27, 1
      %p239 = scmp.ne.s32.totalorder %s234, %s236
      %p240 = scmp.eq.s32.totalorder %s27, 0
      %p241 = por %p239, %p240
      %p242 = scmp.ne.s32.totalorder %s234, %s236
      %p243 = scmp.eq.s32.totalorder %s32, 1
      %p244 = por %p242, %p243
      %p245 = scmp.ne.s32.totalorder %s236, %s237
      %p246 = scmp.eq.s32.totalorder %s32, 0
      %p247 = por %p245, %p246
      %p248 = scmp.ne.s32.totalorder %s236, %s237
      %p249 = scmp.eq.s32.totalorder %s33, 1
      %p250 = por %p248, %p249
      %p252 = scmp.ne.s32.totalorder %s237, %s251
      %p253 = scmp.eq.s32.totalorder %s33, 0
      %p254 = por %p252, %p253
      %s255 = ssub.s32 %s27, %s34
      %p256 = scmp.eq.s32.totalorder %s255, 0
      %s258 = sadd.s32 %s257, 1
      %s259 = scalar_select %p256, %s257, %s258
      %p262 = pneg %p256
      %p263 = scmp.eq.s32.totalorder %s27, 1
      %p264 = por %p262, %p263
      %p265 = scmp.ne.s32.totalorder %s257, %s260
      %p266 = scmp.eq.s32.totalorder %s27, 0
      %p267 = por %p265, %p266
      %p268 = scmp.ne.s32.totalorder %s257, %s260
      %p269 = scmp.eq.s32.totalorder %s32, 1
      %p270 = por %p268, %p269
      %p271 = scmp.ne.s32.totalorder %s260, %s261
      %p272 = scmp.eq.s32.totalorder %s32, 0
      %p273 = por %p271, %p272
      %p274 = scmp.ne.s32.totalorder %s260, %s261
      %p275 = scmp.eq.s32.totalorder %s33, 1
      %p276 = por %p274, %p275
      %p278 = scmp.ne.s32.totalorder %s261, %s277
      %p279 = scmp.eq.s32.totalorder %s33, 0
      %p280 = por %p278, %p279
      %p281 = scmp.le.s32.totalorder 1, %s27
      %p282 = scmp.lt.s32.totalorder %s27, 3
      %p283 = pnand %p281, %p282
      %p284 = pneg %p283
      // Predicated region
      $region9: #{tpu_custom_call.1} parent=5 // pred_check
        _
      $region10: #{tpu_custom_call.1} parent=5 // pred_check_branch
        %286 = sbr.rel (%p283) target = $region12
      $region11: #{tpu_custom_call.1} parent=5 // pred_region
        %s287 = ssub.s32 %s27, 1
        // Predicated region
        $region13: #{tpu_custom_call.1} parent=11 // pred_check
          %p288 = pneg %p100
        $region14: #{tpu_custom_call.1} parent=11 // pred_check_branch
          %290 = sbr.rel (%p288) target = $region16
        $region15: #{tpu_custom_call.1} parent=11 // pred_region
          %s292 = ssub.s32 2048, 2048
          %293 = vsyncadd [#allocation6], %s292
          %s294 = sshll.u32 [#allocation7], 4
          %s295 = int_to_ptr.vmem [resolvable:$true] %s294
          %300 = dma.hbm_to_vmem [thread:$0]  %s2, 2048, %s295, [#allocation6], 64, 64, 4
        $region16: #{tpu_custom_call.1} parent=11 // pred_fallthru
          _
        // Predicated region
        $region17: #{tpu_custom_call.1} parent=11 // pred_check
          %p301 = pneg %p121
        $region18: #{tpu_custom_call.1} parent=11 // pred_check_branch
          %303 = sbr.rel (%p301) target = $region20
        $region19: #{tpu_custom_call.1} parent=11 // pred_region
          _
        $region20: #{tpu_custom_call.1} parent=11 // pred_fallthru
          _
        // Predicated region
        $region21: #{tpu_custom_call.1} parent=11 // pred_check
          %p304 = pneg %p142
        $region22: #{tpu_custom_call.1} parent=11 // pred_check_branch
          %306 = sbr.rel (%p304) target = $region24
        $region23: #{tpu_custom_call.1} parent=11 // pred_region
          %s308 = ssub.s32 3072, 3072
          %309 = vsyncadd [#allocation9], %s308
          %s310 = sshll.u32 [#allocation8], 4
          %s311 = int_to_ptr.vmem [resolvable:$true] %s310
          %316 = dma.hbm_to_vmem [thread:$0]  %s4, 3072, %s311, [#allocation9], 64, 64, 4
        $region24: #{tpu_custom_call.1} parent=11 // pred_fallthru
          _
        // Predicated region
        $region25: #{tpu_custom_call.1} parent=11 // pred_check
          %p317 = pneg %p163
        $region26: #{tpu_custom_call.1} parent=11 // pred_check_branch
          %319 = sbr.rel (%p317) target = $region28
        $region27: #{tpu_custom_call.1} parent=11 // pred_region
          _
        $region28: #{tpu_custom_call.1} parent=11 // pred_fallthru
          _
        // Predicated region
        $region29: #{tpu_custom_call.1} parent=11 // pred_check
          %p320 = pneg %p184
        $region30: #{tpu_custom_call.1} parent=11 // pred_check_branch
          %322 = sbr.rel (%p320) target = $region32
        $region31: #{tpu_custom_call.1} parent=11 // pred_region
          %s324 = ssub.s32 3072, 3072
          %325 = vsyncadd [#allocation9], %s324
          %s326 = sshll.u32 [#allocation10], 4
          %s327 = int_to_ptr.vmem [resolvable:$true] %s326
          %332 = dma.hbm_to_vmem [thread:$0]  %s6, 3072, %s327, [#allocation9], 64, 64, 4
        $region32: #{tpu_custom_call.1} parent=11 // pred_fallthru
          _
        // Predicated region
        $region33: #{tpu_custom_call.1} parent=11 // pred_check
          %p333 = pneg %p205
        $region34: #{tpu_custom_call.1} parent=11 // pred_check_branch
          %335 = sbr.rel (%p333) target = $region36
        $region35: #{tpu_custom_call.1} parent=11 // pred_region
          _
        $region36: #{tpu_custom_call.1} parent=11 // pred_fallthru
          _
        // Predicated region
        $region37: #{tpu_custom_call.1} parent=11 // pred_check
          %p336 = pneg %p226
        $region38: #{tpu_custom_call.1} parent=11 // pred_check_branch
          %338 = sbr.rel (%p336) target = $region40
        $region39: #{tpu_custom_call.1} parent=11 // pred_region
          %s340 = ssub.s32 1024, 1024
          %341 = vsyncadd [#allocation12], %s340
          %s342 = sshll.u32 [#allocation11], 4
          %s343 = int_to_ptr.vmem [resolvable:$true] %s342
          %348 = dma.hbm_to_vmem [thread:$0]  %s8, 1024, %s343, [#allocation12], 64, 64, 4
        $region40: #{tpu_custom_call.1} parent=11 // pred_fallthru
          _
        // Predicated region
        $region41: #{tpu_custom_call.1} parent=11 // pred_check
          %p349 = pneg %p247
        $region42: #{tpu_custom_call.1} parent=11 // pred_check_branch
          %351 = sbr.rel (%p349) target = $region44
        $region43: #{tpu_custom_call.1} parent=11 // pred_region
          _
        $region44: #{tpu_custom_call.1} parent=11 // pred_fallthru
          _
      $region12: #{tpu_custom_call.1} parent=5 // pred_fallthru
        _
      %p352 = scmp.lt.s32.totalorder %s27, 2
      // Predicated region
      $region45: #{tpu_custom_call.1} parent=5 // pred_check
        %p353 = pneg %p352
      $region46: #{tpu_custom_call.1} parent=5 // pred_check_branch
        %355 = sbr.rel (%p353) target = $region48
      $region47: #{tpu_custom_call.1} parent=5 // pred_region
        // Predicated region
        $region49: #{tpu_custom_call.1} parent=47 // pred_check
          %p356 = pneg %p47
        $region50: #{tpu_custom_call.1} parent=47 // pred_check_branch
          %358 = sbr.rel (%p356) target = $region52
        $region51: #{tpu_custom_call.1} parent=47 // pred_region
          %s359 = sand.u32 %s37, 1
          %s360 = scalar_lea.sflag [#allocation3], %s359
          %s361 = sand.u32 %s37, 1
          %s362 = smul.addr %s361, 16
          %s363 = scalar_lea.vmem [#allocation2], %s362
          %s364 = smul.u32 4, %s27
          %s366 = ssub.s32 256, 256
          %367 = vsyncadd %s360, %s366
          %s368 = smul.addr %s364, 64
          %s369 = scalar_lea.hbm %s0, %s368
          %s370 = sshll.u32 %s363, 4
          %s371 = int_to_ptr.vmem [resolvable:$true] %s370
          %376 = dma.hbm_to_vmem [thread:$0]  %s369, 256, %s371, %s360, 64, 64, 4
        $region52: #{tpu_custom_call.1} parent=47 // pred_fallthru
          _
        // Predicated region
        $region53: #{tpu_custom_call.1} parent=47 // pred_check
          %p377 = pneg %p73
        $region54: #{tpu_custom_call.1} parent=47 // pred_check_branch
          %379 = sbr.rel (%p377) target = $region56
        $region55: #{tpu_custom_call.1} parent=47 // pred_region
          %s380 = sand.u32 %s27, 1
          %s381 = scalar_lea.sflag [#allocation6], %s380
          %s382 = sand.u32 %s63, 1
          %s383 = smul.addr %s382, 16
          %s384 = scalar_lea.vmem [#allocation5], %s383
          %s385 = smul.u32 4, %s27
          %s387 = ssub.s32 256, 256
          %388 = vsyncadd %s381, %s387
          %s389 = smul.addr %s385, 64
          %s390 = scalar_lea.hbm %s1, %s389
          %s391 = sshll.u32 %s384, 4
          %s392 = int_to_ptr.vmem [resolvable:$true] %s391
          %397 = dma.hbm_to_vmem [thread:$0]  %s390, 256, %s392, %s381, 64, 64, 4
        $region56: #{tpu_custom_call.1} parent=47 // pred_fallthru
          _
      $region48: #{tpu_custom_call.1} parent=5 // pred_fallthru
        _
      %p398 = scmp.le.s32.totalorder 1, %s27
      %p399 = scmp.lt.s32.totalorder %s27, 3
      %p400 = pnand %p398, %p399
      %p401 = pneg %p400
      // Predicated region
      $region57: #{tpu_custom_call.1} parent=5 // pred_check
        _
      $region58: #{tpu_custom_call.1} parent=5 // pred_check_branch
        %403 = sbr.rel (%p400) target = $region60
      $region59: #{tpu_custom_call.1} parent=5 // pred_region
        %s404 = ssub.s32 %s27, 1
        %s405 = sand.u32 %s40, 1
        %s406 = scalar_lea.sflag [#allocation3], %s405
        %s407 = sand.u32 %s40, 1
        %s408 = smul.addr %s407, 16
        %s409 = scalar_lea.vmem [#allocation2], %s408
        // Predicated region
        $region61: #{tpu_custom_call.1} parent=59 // pred_check
          %p410 = pneg %p53
        $region62: #{tpu_custom_call.1} parent=59 // pred_check_branch
          %412 = sbr.rel (%p410) target = $region64
        $region63: #{tpu_custom_call.1} parent=59 // pred_region
          %413 = dma.done %s406, 256
        $region64: #{tpu_custom_call.1} parent=59 // pred_fallthru
          _
        %s414 = sand.u32 %s32, 1
        %s415 = scalar_lea.sflag [#allocation6], %s414
        %s416 = sand.u32 %s66, 1
        %s417 = smul.addr %s416, 16
        %s418 = scalar_lea.vmem [#allocation5], %s417
        // Predicated region
        $region65: #{tpu_custom_call.1} parent=59 // pred_check
          %p419 = pneg %p79
        $region66: #{tpu_custom_call.1} parent=59 // pred_check_branch
          %421 = sbr.rel (%p419) target = $region68
        $region67: #{tpu_custom_call.1} parent=59 // pred_region
          %422 = dma.done %s415, 256
        $region68: #{tpu_custom_call.1} parent=59 // pred_fallthru
          _
        // Predicated region
        $region69: #{tpu_custom_call.1} parent=59 // pred_check
          %p423 = pneg %p100
        $region70: #{tpu_custom_call.1} parent=59 // pred_check_branch
          %425 = sbr.rel (%p423) target = $region72
        $region71: #{tpu_custom_call.1} parent=59 // pred_region
          %426 = dma.done [#allocation6], 2048
        $region72: #{tpu_custom_call.1} parent=59 // pred_fallthru
          _
        // Predicated region
        $region73: #{tpu_custom_call.1} parent=59 // pred_check
          %p427 = pneg %p142
        $region74: #{tpu_custom_call.1} parent=59 // pred_check_branch
          %429 = sbr.rel (%p427) target = $region76
        $region75: #{tpu_custom_call.1} parent=59 // pred_region
          %430 = dma.done [#allocation9], 3072
        $region76: #{tpu_custom_call.1} parent=59 // pred_fallthru
          _
        // Predicated region
        $region77: #{tpu_custom_call.1} parent=59 // pred_check
          %p431 = pneg %p184
        $region78: #{tpu_custom_call.1} parent=59 // pred_check_branch
          %433 = sbr.rel (%p431) target = $region80
        $region79: #{tpu_custom_call.1} parent=59 // pred_region
          %434 = dma.done [#allocation9], 3072
        $region80: #{tpu_custom_call.1} parent=59 // pred_fallthru
          _
        // Predicated region
        $region81: #{tpu_custom_call.1} parent=59 // pred_check
          %p435 = pneg %p226
        $region82: #{tpu_custom_call.1} parent=59 // pred_check_branch
          %437 = sbr.rel (%p435) target = $region84
        $region83: #{tpu_custom_call.1} parent=59 // pred_region
          %438 = dma.done [#allocation12], 1024
        $region84: #{tpu_custom_call.1} parent=59 // pred_fallthru
          _
        %s439 = sand.u32 %s40, 1
        %s440 = scalar_lea.sflag [#allocation3], %s439
        %s441 = sand.u32 %s40, 1
        %s442 = smul.addr %s441, 16
        %s443 = scalar_lea.vmem [#allocation2], %s442
        %p444 = pneg %p53
        %p445 = pneg %p50
        %s446 = sand.u32 %s32, 1
        %s447 = scalar_lea.sflag [#allocation6], %s446
        %s448 = sand.u32 %s66, 1
        %s449 = smul.addr %s448, 16
        %s450 = scalar_lea.vmem [#allocation5], %s449
        %p451 = pneg %p79
        %p452 = pneg %p76
        %p453 = pneg %p100
        %p454 = pneg %p97
        %p455 = pneg %p121
        %p456 = pneg %p118
        %p457 = pneg %p142
        %p458 = pneg %p139
        %p459 = pneg %p163
        %p460 = pneg %p160
        %p461 = pneg %p184
        %p462 = pneg %p181
        %p463 = pneg %p205
        %p464 = pneg %p202
        %p465 = pneg %p226
        %p466 = pneg %p223
        %p467 = pneg %p247
        %p468 = pneg %p244
        %p469 = pneg %p273
        %p470 = pneg %p270
        %s471 = sand.u32 %s260, 1
        %s472 = scalar_lea.sflag [#allocation4], %s471
        %s473 = sand.u32 %s260, 1
        %s474 = smul.addr %s473, 4
        %s475 = scalar_lea.vmem [#allocation13], %s474
        %s476 = smul.u32 4, %s32
        %s477 = smul.u32 4, %s32
        %v479 = vld [vmem:[%s409] sm:$0xf]
        %v480 = vld [vmem:[%s409 + $0x4] sm:$0xf]
        %v481 = vld [vmem:[%s409 + $0x8] sm:$0xf]
        %v482 = vld [vmem:[%s409 + $0xc] sm:$0xf]
        %v483 = vld [vmem:[%s418] sm:$0xf]
        %v484 = vld [vmem:[%s418 + $0x4] sm:$0xf]
        %v485 = vld [vmem:[%s418 + $0x8] sm:$0xf]
        %v486 = vld [vmem:[%s418 + $0xc] sm:$0xf]
        %v487 = vld [vmem:[#allocation7] sm:$0xf]
        %v488 = vld [vmem:[#allocation7 + $0x4] sm:$0xf]
        %v489 = vld [vmem:[#allocation7 + $0x8] sm:$0xf]
        %v490 = vld [vmem:[#allocation7 + $0xc] sm:$0xf]
        %v491 = vld [vmem:[#allocation7 + $0x10] sm:$0xf]
        %v492 = vld [vmem:[#allocation7 + $0x14] sm:$0xf]
        %v493 = vld [vmem:[#allocation7 + $0x18] sm:$0xf]
        %v494 = vld [vmem:[#allocation7 + $0x1c] sm:$0xf]
        %v495 = vld [vmem:[#allocation7 + $0x20] sm:$0xf]
        %v496 = vld [vmem:[#allocation7 + $0x24] sm:$0xf]
        %v497 = vld [vmem:[#allocation7 + $0x28] sm:$0xf]
        %v498 = vld [vmem:[#allocation7 + $0x2c] sm:$0xf]
        %v499 = vld [vmem:[#allocation7 + $0x30] sm:$0xf]
        %v500 = vld [vmem:[#allocation7 + $0x34] sm:$0xf]
        %v501 = vld [vmem:[#allocation7 + $0x38] sm:$0xf]
        %v502 = vld [vmem:[#allocation7 + $0x3c] sm:$0xf]
        %v503 = vld [vmem:[#allocation7 + $0x40] sm:$0xf]
        %v504 = vld [vmem:[#allocation7 + $0x44] sm:$0xf]
        %v505 = vld [vmem:[#allocation7 + $0x48] sm:$0xf]
        %v506 = vld [vmem:[#allocation7 + $0x4c] sm:$0xf]
        %v507 = vld [vmem:[#allocation7 + $0x50] sm:$0xf]
        %v508 = vld [vmem:[#allocation7 + $0x54] sm:$0xf]
        %v509 = vld [vmem:[#allocation7 + $0x58] sm:$0xf]
        %v510 = vld [vmem:[#allocation7 + $0x5c] sm:$0xf]
        %v511 = vld [vmem:[#allocation7 + $0x60] sm:$0xf]
        %v512 = vld [vmem:[#allocation7 + $0x64] sm:$0xf]
        %v513 = vld [vmem:[#allocation7 + $0x68] sm:$0xf]
        %v514 = vld [vmem:[#allocation7 + $0x6c] sm:$0xf]
        %v515 = vld [vmem:[#allocation7 + $0x70] sm:$0xf]
        %v516 = vld [vmem:[#allocation7 + $0x74] sm:$0xf]
        %v517 = vld [vmem:[#allocation7 + $0x78] sm:$0xf]
        %v518 = vld [vmem:[#allocation7 + $0x7c] sm:$0xf]
        %v519 = vld [vmem:[%s3] sm:$0x1]
        %v520 = vld [vmem:[%s3 + $0x1] sm:$0x1]
        %v521 = vlaneseq
        %v522 = vshrl.u32 %v521, 7
        %v523 = vsub.s32 0, %v522
        %v524 = vrot.slane %v519, %v523
        %v529 = vunpack.c.l.b16 %v479
        %v530 = vunpack.c.l.b16 %v480
        %v531 = vunpack.c.l.b16 %v481
        %v532 = vunpack.c.l.b16 %v482
        %v533 = vpack.c.b16 %v530, %v529
        %v534 = vpack.c.b16 %v532, %v531
        %v553 = vunpack.c.l.b16 %v487
        %v554 = vunpack.c.l.b16 %v488
        %v555 = vunpack.c.l.b16 %v489
        %v556 = vunpack.c.l.b16 %v490
        %v557 = vunpack.c.l.b16 %v491
        %v558 = vunpack.c.l.b16 %v492
        %v559 = vunpack.c.l.b16 %v493
        %v560 = vunpack.c.l.b16 %v494
        %v561 = vunpack.c.l.b16 %v495
        %v562 = vunpack.c.l.b16 %v496
        %v563 = vunpack.c.l.b16 %v497
        %v564 = vunpack.c.l.b16 %v498
        %v565 = vunpack.c.l.b16 %v499
        %v566 = vunpack.c.l.b16 %v500
        %v567 = vunpack.c.l.b16 %v501
        %v568 = vunpack.c.l.b16 %v502
        %v569 = vpack.c.b16 %v554, %v553
        %v570 = vpack.c.b16 %v556, %v555
        %v571 = vpack.c.b16 %v558, %v557
        %v572 = vpack.c.b16 %v560, %v559
        %v573 = vpack.c.b16 %v562, %v561
        %v574 = vpack.c.b16 %v564, %v563
        %v575 = vpack.c.b16 %v566, %v565
        %v576 = vpack.c.b16 %v568, %v567
        %585 = vmatprep.subr.bf16.mxu0 0
        %586 = vmatpush1.bf16.msra.mxu0 %v569
        %587 = vmatprep.subr.bf16.mxu0 0
        %588 = vmatpush1.bf16.msra.mxu0 %v570
        %589 = vmatprep.subr.bf16.mxu0 0
        %590 = vmatpush1.bf16.msra.mxu0 %v571
        %591 = vmatprep.subr.bf16.mxu0 0
        %592 = vmatpush1.bf16.msra.mxu0 %v572
        %593 = vmatprep.subr.bf16.mxu0 0
        %594 = vmatpush1.bf16.msra.mxu0 %v573
        %595 = vmatprep.subr.bf16.mxu0 0
        %596 = vmatpush1.bf16.msra.mxu0 %v574
        %597 = vmatprep.subr.bf16.mxu0 0
        %598 = vmatpush1.bf16.msra.mxu0 %v575
        %599 = vmatprep.subr.bf16.mxu0 0
        %600 = vmatpush1.bf16.msra.mxu0 %v576
        %601 = vmatprep.subr.bf16.mxu0 0
        %602 = vmatpush1.bf16.msra.mxu0 0
        %603 = vmatprep.subr.bf16.mxu0 0
        %604 = vmatpush1.bf16.msra.mxu0 0
        %605 = vmatprep.subr.bf16.mxu0 0
        %606 = vmatpush1.bf16.msra.mxu0 0
        %607 = vmatprep.subr.bf16.mxu0 0
        %608 = vmatpush1.bf16.msra.mxu0 0
        %609 = vmatprep.subr.bf16.mxu0 0
        %610 = vmatpush1.bf16.msra.mxu0 0
        %611 = vmatprep.subr.bf16.mxu0 0
        %612 = vmatpush1.bf16.msra.mxu0 0
        %613 = vmatprep.subr.bf16.mxu0 0
        %614 = vmatpush1.bf16.msra.mxu0 0
        %615 = vmatprep.subr.bf16.mxu0 0
        %616 = vmatpush1.bf16.msra.mxu0 0
        %617 = vmatprep.mubr.bf16.mxu0 0
        %618 = vmatmul.mubr.bf16.gmra.mrb[0].mxu0 %v533
        %v619 = vpop.f32.mrb[0].mxu0
        %v620 = vadd.f32 %v524, %v619
        %v621 = vpop.f32.mrb[0].mxu0
        %v622 = vpop.f32.mrb[0].mxu0
        %v623 = vadd.f32 %v524, %v622
        %v624 = vpop.f32.mrb[0].mxu0
        %625 = vmatprep.mubr.bf16.mxu0 0
        %626 = vmatmul.mubr.bf16.gmra.mrb[0].mxu0 %v534
        %v627 = vpop.f32.mrb[0].mxu0
        %v628 = vadd.f32 %v524, %v627
        %v629 = vpop.f32.mrb[0].mxu0
        %v630 = vpop.f32.mrb[0].mxu0
        %v631 = vadd.f32 %v524, %v630
        %v632 = vpop.f32.mrb[0].mxu0
        %633 = vdwg.mxu0
        %v634 = vmax.f32 %v620, 0.0
        %v635 = vmax.f32 %v623, 0.0
        %v636 = vmax.f32 %v628, 0.0
        %v637 = vmax.f32 %v631, 0.0
        %v638 = vpack.c.bf16 %v635, %v634
        %v639 = vpack.c.bf16 %v637, %v636
        %v640 = vlaneseq
        %v641 = vshrl.u32 %v640, 7
        %v642 = vsub.s32 0, %v641
        %v643 = vrot.slane %v520, %v642
        %v660 = vunpack.c.l.b16 %v503
        %v661 = vunpack.c.l.b16 %v504
        %v662 = vunpack.c.l.b16 %v505
        %v663 = vunpack.c.l.b16 %v506
        %v664 = vunpack.c.l.b16 %v507
        %v665 = vunpack.c.l.b16 %v508
        %v666 = vunpack.c.l.b16 %v509
        %v667 = vunpack.c.l.b16 %v510
        %v668 = vunpack.c.l.b16 %v511
        %v669 = vunpack.c.l.b16 %v512
        %v670 = vunpack.c.l.b16 %v513
        %v671 = vunpack.c.l.b16 %v514
        %v672 = vunpack.c.l.b16 %v515
        %v673 = vunpack.c.l.b16 %v516
        %v674 = vunpack.c.l.b16 %v517
        %v675 = vunpack.c.l.b16 %v518
        %v676 = vpack.c.b16 %v661, %v660
        %v677 = vpack.c.b16 %v663, %v662
        %v678 = vpack.c.b16 %v665, %v664
        %v679 = vpack.c.b16 %v667, %v666
        %v680 = vpack.c.b16 %v669, %v668
        %v681 = vpack.c.b16 %v671, %v670
        %v682 = vpack.c.b16 %v673, %v672
        %v683 = vpack.c.b16 %v675, %v674
        %692 = vmatprep.subr.bf16.mxu0 0
        %693 = vmatpush1.bf16.msra.mxu0 %v676
        %694 = vmatprep.subr.bf16.mxu0 0
        %695 = vmatpush1.bf16.msra.mxu0 %v677
        %696 = vmatprep.subr.bf16.mxu0 0
        %697 = vmatpush1.bf16.msra.mxu0 %v678
        %698 = vmatprep.subr.bf16.mxu0 0
        %699 = vmatpush1.bf16.msra.mxu0 %v679
        %700 = vmatprep.subr.bf16.mxu0 0
        %701 = vmatpush1.bf16.msra.mxu0 %v680
        %702 = vmatprep.subr.bf16.mxu0 0
        %703 = vmatpush1.bf16.msra.mxu0 %v681
        %704 = vmatprep.subr.bf16.mxu0 0
        %705 = vmatpush1.bf16.msra.mxu0 %v682
        %706 = vmatprep.subr.bf16.mxu0 0
        %707 = vmatpush1.bf16.msra.mxu0 %v683
        %708 = vmatprep.subr.bf16.mxu0 0
        %709 = vmatpush1.bf16.msra.mxu0 0
        %710 = vmatprep.subr.bf16.mxu0 0
        %711 = vmatpush1.bf16.msra.mxu0 0
        %712 = vmatprep.subr.bf16.mxu0 0
        %713 = vmatpush1.bf16.msra.mxu0 0
        %714 = vmatprep.subr.bf16.mxu0 0
        %715 = vmatpush1.bf16.msra.mxu0 0
        %716 = vmatprep.subr.bf16.mxu0 0
        %717 = vmatpush1.bf16.msra.mxu0 0
        %718 = vmatprep.subr.bf16.mxu0 0
        %719 = vmatpush1.bf16.msra.mxu0 0
        %720 = vmatprep.subr.bf16.mxu0 0
        %721 = vmatpush1.bf16.msra.mxu0 0
        %722 = vmatprep.subr.bf16.mxu0 0
        %723 = vmatpush1.bf16.msra.mxu0 0
        %724 = vmatprep.mubr.bf16.mxu0 0
        %725 = vmatmul.mubr.bf16.gmra.mrb[0].mxu0 %v638
        %v726 = vpop.f32.mrb[0].mxu0
        %v727 = vadd.f32 %v643, %v726
        %v728 = vpop.f32.mrb[0].mxu0
        %v729 = vpop.f32.mrb[0].mxu0
        %v730 = vadd.f32 %v643, %v729
        %v731 = vpop.f32.mrb[0].mxu0
        %732 = vmatprep.mubr.bf16.mxu0 0
        %733 = vmatmul.mubr.bf16.gmra.mrb[0].mxu0 %v639
        %v734 = vpop.f32.mrb[0].mxu0
        %v735 = vadd.f32 %v643, %v734
        %v736 = vpop.f32.mrb[0].mxu0
        %v737 = vpop.f32.mrb[0].mxu0
        %v738 = vadd.f32 %v643, %v737
        %v739 = vpop.f32.mrb[0].mxu0
        %740 = vdwg.mxu0
        %v741 = vmax.f32 %v727, 0.0
        %v742 = vmax.f32 %v730, 0.0
        %v743 = vmax.f32 %v735, 0.0
        %v744 = vmax.f32 %v738, 0.0
        %v749 = vunpack.c.l.b16 %v483
        %v750 = vunpack.c.l.b16 %v484
        %v751 = vunpack.c.l.b16 %v485
        %v752 = vunpack.c.l.b16 %v486
        %v753 = vpack.c.b16 %v750, %v749
        %v754 = vpack.c.b16 %v752, %v751
        %757 = vmatprep.subr.bf16.mxu0 0
        %758 = vmatpush1.bf16.msra.mxu0 %v569
        %759 = vmatprep.subr.bf16.mxu0 0
        %760 = vmatpush1.bf16.msra.mxu0 %v570
        %761 = vmatprep.subr.bf16.mxu0 0
        %762 = vmatpush1.bf16.msra.mxu0 %v571
        %763 = vmatprep.subr.bf16.mxu0 0
        %764 = vmatpush1.bf16.msra.mxu0 %v572
        %765 = vmatprep.subr.bf16.mxu0 0
        %766 = vmatpush1.bf16.msra.mxu0 %v573
        %767 = vmatprep.subr.bf16.mxu0 0
        %768 = vmatpush1.bf16.msra.mxu0 %v574
        %769 = vmatprep.subr.bf16.mxu0 0
        %770 = vmatpush1.bf16.msra.mxu0 %v575
        %771 = vmatprep.subr.bf16.mxu0 0
        %772 = vmatpush1.bf16.msra.mxu0 %v576
        %773 = vmatprep.subr.bf16.mxu0 0
        %774 = vmatpush1.bf16.msra.mxu0 0
        %775 = vmatprep.subr.bf16.mxu0 0
        %776 = vmatpush1.bf16.msra.mxu0 0
        %777 = vmatprep.subr.bf16.mxu0 0
        %778 = vmatpush1.bf16.msra.mxu0 0
        %779 = vmatprep.subr.bf16.mxu0 0
        %780 = vmatpush1.bf16.msra.mxu0 0
        %781 = vmatprep.subr.bf16.mxu0 0
        %782 = vmatpush1.bf16.msra.mxu0 0
        %783 = vmatprep.subr.bf16.mxu0 0
        %784 = vmatpush1.bf16.msra.mxu0 0
        %785 = vmatprep.subr.bf16.mxu0 0
        %786 = vmatpush1.bf16.msra.mxu0 0
        %787 = vmatprep.subr.bf16.mxu0 0
        %788 = vmatpush1.bf16.msra.mxu0 0
        %789 = vmatprep.mubr.bf16.mxu0 0
        %790 = vmatmul.mubr.bf16.gmra.mrb[0].mxu0 %v753
        %v791 = vpop.f32.mrb[0].mxu0
        %v792 = vadd.f32 %v524, %v791
        %v793 = vpop.f32.mrb[0].mxu0
        %v794 = vpop.f32.mrb[0].mxu0
        %v795 = vadd.f32 %v524, %v794
        %v796 = vpop.f32.mrb[0].mxu0
        %797 = vmatprep.mubr.bf16.mxu0 0
        %798 = vmatmul.mubr.bf16.gmra.mrb[0].mxu0 %v754
        %v799 = vpop.f32.mrb[0].mxu0
        %v800 = vadd.f32 %v524, %v799
        %v801 = vpop.f32.mrb[0].mxu0
        %v802 = vpop.f32.mrb[0].mxu0
        %v803 = vadd.f32 %v524, %v802
        %v804 = vpop.f32.mrb[0].mxu0
        %805 = vdwg.mxu0
        %v806 = vmax.f32 %v792, 0.0
        %v807 = vmax.f32 %v795, 0.0
        %v808 = vmax.f32 %v800, 0.0
        %v809 = vmax.f32 %v803, 0.0
        %v810 = vpack.c.bf16 %v807, %v806
        %v811 = vpack.c.bf16 %v809, %v808
        %812 = vmatprep.subr.bf16.mxu0 0
        %813 = vmatpush1.bf16.msra.mxu0 %v676
        %814 = vmatprep.subr.bf16.mxu0 0
        %815 = vmatpush1.bf16.msra.mxu0 %v677
        %816 = vmatprep.subr.bf16.mxu0 0
        %817 = vmatpush1.bf16.msra.mxu0 %v678
        %818 = vmatprep.subr.bf16.mxu0 0
        %819 = vmatpush1.bf16.msra.mxu0 %v679
        %820 = vmatprep.subr.bf16.mxu0 0
        %821 = vmatpush1.bf16.msra.mxu0 %v680
        %822 = vmatprep.subr.bf16.mxu0 0
        %823 = vmatpush1.bf16.msra.mxu0 %v681
        %824 = vmatprep.subr.bf16.mxu0 0
        %825 = vmatpush1.bf16.msra.mxu0 %v682
        %826 = vmatprep.subr.bf16.mxu0 0
        %827 = vmatpush1.bf16.msra.mxu0 %v683
        %828 = vmatprep.subr.bf16.mxu0 0
        %829 = vmatpush1.bf16.msra.mxu0 0
        %830 = vmatprep.subr.bf16.mxu0 0
        %831 = vmatpush1.bf16.msra.mxu0 0
        %832 = vmatprep.subr.bf16.mxu0 0
        %833 = vmatpush1.bf16.msra.mxu0 0
        %834 = vmatprep.subr.bf16.mxu0 0
        %835 = vmatpush1.bf16.msra.mxu0 0
        %836 = vmatprep.subr.bf16.mxu0 0
        %837 = vmatpush1.bf16.msra.mxu0 0
        %838 = vmatprep.subr.bf16.mxu0 0
        %839 = vmatpush1.bf16.msra.mxu0 0
        %840 = vmatprep.subr.bf16.mxu0 0
        %841 = vmatpush1.bf16.msra.mxu0 0
        %842 = vmatprep.subr.bf16.mxu0 0
        %843 = vmatpush1.bf16.msra.mxu0 0
        %844 = vmatprep.mubr.bf16.mxu0 0
        %845 = vmatmul.mubr.bf16.gmra.mrb[0].mxu0 %v810
        %v846 = vpop.f32.mrb[0].mxu0
        %v847 = vadd.f32 %v643, %v846
        %v848 = vpop.f32.mrb[0].mxu0
        %v849 = vpop.f32.mrb[0].mxu0
        %v850 = vadd.f32 %v643, %v849
        %v851 = vpop.f32.mrb[0].mxu0
        %852 = vmatprep.mubr.bf16.mxu0 0
        %853 = vmatmul.mubr.bf16.gmra.mrb[0].mxu0 %v811
        %v854 = vpop.f32.mrb[0].mxu0
        %v855 = vadd.f32 %v643, %v854
        %v856 = vpop.f32.mrb[0].mxu0
        %v857 = vpop.f32.mrb[0].mxu0
        %v858 = vadd.f32 %v643, %v857
        %v859 = vpop.f32.mrb[0].mxu0
        %860 = vdwg.mxu0
        %v861 = vmax.f32 %v847, 0.0
        %v862 = vmax.f32 %v850, 0.0
        %v863 = vmax.f32 %v855, 0.0
        %v864 = vmax.f32 %v858, 0.0
        %v865 = vpack.c.bf16 %v741, %v741
        %v866 = vpack.c.bf16 %v742, %v742
        %v867 = vpack.c.bf16 %v743, %v743
        %v868 = vpack.c.bf16 %v744, %v744
        %v869 = vpack.c.bf16 %v861, %v861
        %v870 = vpack.c.bf16 %v862, %v862
        %v871 = vpack.c.bf16 %v863, %v863
        %v872 = vpack.c.bf16 %v864, %v864
        %873 = vmatprep.subr.bf16.mxu0 0
        %874 = vmatpush1.bf16.xpose.msra.mxu0 %v869
        %875 = vmatprep.subr.bf16.mxu0 0
        %876 = vmatpush1.bf16.xpose.msra.mxu0 0
        %877 = vmatprep.subr.bf16.mxu0 0
        %878 = vmatpush1.bf16.xpose.msra.mxu0 0
        %879 = vmatprep.subr.bf16.mxu0 0
        %880 = vmatpush1.bf16.xpose.msra.mxu0 0
        %881 = vmatprep.subr.bf16.mxu0 0
        %882 = vmatpush1.bf16.xpose.msra.mxu0 0
        %883 = vmatprep.subr.bf16.mxu0 0
        %884 = vmatpush1.bf16.xpose.msra.mxu0 0
        %885 = vmatprep.subr.bf16.mxu0 0
        %886 = vmatpush1.bf16.xpose.msra.mxu0 0
        %887 = vmatprep.subr.bf16.mxu0 0
        %888 = vmatpush1.bf16.xpose.msra.mxu0 0
        %889 = vmatprep.subr.bf16.mxu0 0
        %890 = vmatpush1.bf16.xpose.msra.mxu0 0
        %891 = vmatprep.subr.bf16.mxu0 0
        %892 = vmatpush1.bf16.xpose.msra.mxu0 0
        %893 = vmatprep.subr.bf16.mxu0 0
        %894 = vmatpush1.bf16.xpose.msra.mxu0 0
        %895 = vmatprep.subr.bf16.mxu0 0
        %896 = vmatpush1.bf16.xpose.msra.mxu0 0
        %897 = vmatprep.subr.bf16.mxu0 0
        %898 = vmatpush1.bf16.xpose.msra.mxu0 0
        %899 = vmatprep.subr.bf16.mxu0 0
        %900 = vmatpush1.bf16.xpose.msra.mxu0 0
        %901 = vmatprep.subr.bf16.mxu0 0
        %902 = vmatpush1.bf16.xpose.msra.mxu0 0
        %903 = vmatprep.subr.bf16.mxu0 0
        %904 = vmatpush1.bf16.xpose.msra.mxu0 0
        %905 = vmatprep.mubr.bf16.mxu0 0
        %906 = vmatmul.mubr.bf16.gmra.mrb[0].mxu0 %v865
        %v907 = vpop.f32.mrb[0].mxu0
        %v908 = vadd.f32 0.0, %v907
        %v909 = vpop.f32.mrb[0].mxu0
        %v910 = vpop.f32.mrb[0].mxu0
        %v911 = vpop.f32.mrb[0].mxu0
        %912 = vdwg.mxu0
        %913 = vmatprep.subr.bf16.mxu0 0
        %914 = vmatpush1.bf16.xpose.msra.mxu0 %v870
        %915 = vmatprep.subr.bf16.mxu0 0
        %916 = vmatpush1.bf16.xpose.msra.mxu0 0
        %917 = vmatprep.subr.bf16.mxu0 0
        %918 = vmatpush1.bf16.xpose.msra.mxu0 0
        %919 = vmatprep.subr.bf16.mxu0 0
        %920 = vmatpush1.bf16.xpose.msra.mxu0 0
        %921 = vmatprep.subr.bf16.mxu0 0
        %922 = vmatpush1.bf16.xpose.msra.mxu0 0
        %923 = vmatprep.subr.bf16.mxu0 0
        %924 = vmatpush1.bf16.xpose.msra.mxu0 0
        %925 = vmatprep.subr.bf16.mxu0 0
        %926 = vmatpush1.bf16.xpose.msra.mxu0 0
        %927 = vmatprep.subr.bf16.mxu0 0
        %928 = vmatpush1.bf16.xpose.msra.mxu0 0
        %929 = vmatprep.subr.bf16.mxu0 0
        %930 = vmatpush1.bf16.xpose.msra.mxu0 0
        %931 = vmatprep.subr.bf16.mxu0 0
        %932 = vmatpush1.bf16.xpose.msra.mxu0 0
        %933 = vmatprep.subr.bf16.mxu0 0
        %934 = vmatpush1.bf16.xpose.msra.mxu0 0
        %935 = vmatprep.subr.bf16.mxu0 0
        %936 = vmatpush1.bf16.xpose.msra.mxu0 0
        %937 = vmatprep.subr.bf16.mxu0 0
        %938 = vmatpush1.bf16.xpose.msra.mxu0 0
        %939 = vmatprep.subr.bf16.mxu0 0
        %940 = vmatpush1.bf16.xpose.msra.mxu0 0
        %941 = vmatprep.subr.bf16.mxu0 0
        %942 = vmatpush1.bf16.xpose.msra.mxu0 0
        %943 = vmatprep.subr.bf16.mxu0 0
        %944 = vmatpush1.bf16.xpose.msra.mxu0 0
        %945 = vmatprep.mubr.bf16.mxu0 0
        %946 = vmatmul.mubr.bf16.gmra.mrb[0].mxu0 %v866
        %v947 = vpop.f32.mrb[0].mxu0
        %v948 = vadd.f32 0.0, %v947
        %v949 = vpop.f32.mrb[0].mxu0
        %v950 = vpop.f32.mrb[0].mxu0
        %v951 = vpop.f32.mrb[0].mxu0
        %952 = vdwg.mxu0
        %953 = vmatprep.subr.bf16.mxu0 0
        %954 = vmatpush1.bf16.xpose.msra.mxu0 %v871
        %955 = vmatprep.subr.bf16.mxu0 0
        %956 = vmatpush1.bf16.xpose.msra.mxu0 0
        %957 = vmatprep.subr.bf16.mxu0 0
        %958 = vmatpush1.bf16.xpose.msra.mxu0 0
        %959 = vmatprep.subr.bf16.mxu0 0
        %960 = vmatpush1.bf16.xpose.msra.mxu0 0
        %961 = vmatprep.subr.bf16.mxu0 0
        %962 = vmatpush1.bf16.xpose.msra.mxu0 0
        %963 = vmatprep.subr.bf16.mxu0 0
        %964 = vmatpush1.bf16.xpose.msra.mxu0 0
        %965 = vmatprep.subr.bf16.mxu0 0
        %966 = vmatpush1.bf16.xpose.msra.mxu0 0
        %967 = vmatprep.subr.bf16.mxu0 0
        %968 = vmatpush1.bf16.xpose.msra.mxu0 0
        %969 = vmatprep.subr.bf16.mxu0 0
        %970 = vmatpush1.bf16.xpose.msra.mxu0 0
        %971 = vmatprep.subr.bf16.mxu0 0
        %972 = vmatpush1.bf16.xpose.msra.mxu0 0
        %973 = vmatprep.subr.bf16.mxu0 0
        %974 = vmatpush1.bf16.xpose.msra.mxu0 0
        %975 = vmatprep.subr.bf16.mxu0 0
        %976 = vmatpush1.bf16.xpose.msra.mxu0 0
        %977 = vmatprep.subr.bf16.mxu0 0
        %978 = vmatpush1.bf16.xpose.msra.mxu0 0
        %979 = vmatprep.subr.bf16.mxu0 0
        %980 = vmatpush1.bf16.xpose.msra.mxu0 0
        %981 = vmatprep.subr.bf16.mxu0 0
        %982 = vmatpush1.bf16.xpose.msra.mxu0 0
        %983 = vmatprep.subr.bf16.mxu0 0
        %984 = vmatpush1.bf16.xpose.msra.mxu0 0
        %985 = vmatprep.mubr.bf16.mxu0 0
        %986 = vmatmul.mubr.bf16.gmra.mrb[0].mxu0 %v867
        %v987 = vpop.f32.mrb[0].mxu0
        %v988 = vadd.f32 0.0, %v987
        %v989 = vpop.f32.mrb[0].mxu0
        %v990 = vpop.f32.mrb[0].mxu0
        %v991 = vpop.f32.mrb[0].mxu0
        %992 = vdwg.mxu0
        %993 = vmatprep.subr.bf16.mxu0 0
        %994 = vmatpush1.bf16.xpose.msra.mxu0 %v872
        %995 = vmatprep.subr.bf16.mxu0 0
        %996 = vmatpush1.bf16.xpose.msra.mxu0 0
        %997 = vmatprep.subr.bf16.mxu0 0
        %998 = vmatpush1.bf16.xpose.msra.mxu0 0
        %999 = vmatprep.subr.bf16.mxu0 0
        %1000 = vmatpush1.bf16.xpose.msra.mxu0 0
        %1001 = vmatprep.subr.bf16.mxu0 0
        %1002 = vmatpush1.bf16.xpose.msra.mxu0 0
        %1003 = vmatprep.subr.bf16.mxu0 0
        %1004 = vmatpush1.bf16.xpose.msra.mxu0 0
        %1005 = vmatprep.subr.bf16.mxu0 0
        %1006 = vmatpush1.bf16.xpose.msra.mxu0 0
        %1007 = vmatprep.subr.bf16.mxu0 0
        %1008 = vmatpush1.bf16.xpose.msra.mxu0 0
        %1009 = vmatprep.subr.bf16.mxu0 0
        %1010 = vmatpush1.bf16.xpose.msra.mxu0 0
        %1011 = vmatprep.subr.bf16.mxu0 0
        %1012 = vmatpush1.bf16.xpose.msra.mxu0 0
        %1013 = vmatprep.subr.bf16.mxu0 0
        %1014 = vmatpush1.bf16.xpose.msra.mxu0 0
        %1015 = vmatprep.subr.bf16.mxu0 0
        %1016 = vmatpush1.bf16.xpose.msra.mxu0 0
        %1017 = vmatprep.subr.bf16.mxu0 0
        %1018 = vmatpush1.bf16.xpose.msra.mxu0 0
        %1019 = vmatprep.subr.bf16.mxu0 0
        %1020 = vmatpush1.bf16.xpose.msra.mxu0 0
        %1021 = vmatprep.subr.bf16.mxu0 0
        %1022 = vmatpush1.bf16.xpose.msra.mxu0 0
        %1023 = vmatprep.subr.bf16.mxu0 0
        %1024 = vmatpush1.bf16.xpose.msra.mxu0 0
        %1025 = vmatprep.mubr.bf16.mxu0 0
        %1026 = vmatmul.mubr.bf16.gmra.mrb[0].mxu0 %v868
        %v1027 = vpop.f32.mrb[0].mxu0
        %v1028 = vadd.f32 0.0, %v1027
        %v1029 = vpop.f32.mrb[0].mxu0
        %v1030 = vpop.f32.mrb[0].mxu0
        %v1031 = vpop.f32.mrb[0].mxu0
        %1032 = vdwg.mxu0
        %1033 = vxpose.xlu0.b32.start [1/16] %v908, 128
        %1034 = vxpose.xlu0.b32.cont [2/16] 0.0, 128
        %1035 = vxpose.xlu0.b32.cont [3/16] 0.0, 128
        %1036 = vxpose.xlu0.b32.cont [4/16] 0.0, 128
        %1037 = vxpose.xlu0.b32.cont [5/16] 0.0, 128
        %1038 = vxpose.xlu0.b32.cont [6/16] 0.0, 128
        %1039 = vxpose.xlu0.b32.cont [7/16] 0.0, 128
        %1040 = vxpose.xlu0.b32.cont [8/16] 0.0, 128
        %1041 = vxpose.xlu0.b32.cont [9/16] 0.0, 128
        %1042 = vxpose.xlu0.b32.cont [10/16] 0.0, 128
        %1043 = vxpose.xlu0.b32.cont [11/16] 0.0, 128
        %1044 = vxpose.xlu0.b32.cont [12/16] 0.0, 128
        %1045 = vxpose.xlu0.b32.cont [13/16] 0.0, 128
        %1046 = vxpose.xlu0.b32.cont [14/16] 0.0, 128
        %1047 = vxpose.xlu0.b32.cont [15/16] 0.0, 128
        %1048 = vxpose.xlu0.b32.end [16/16] 0.0, 128
        %v1049 = vpop.trf.xlu0
        %v1050 = vpop.trf.xlu0
        %v1051 = vpop.trf.xlu0
        %v1052 = vpop.trf.xlu0
        %v1053 = vpop.trf.xlu0
        %v1054 = vpop.trf.xlu0
        %v1055 = vpop.trf.xlu0
        %v1056 = vpop.trf.xlu0
        %v1057 = vpop.trf.xlu0
        %v1058 = vpop.trf.xlu0
        %v1059 = vpop.trf.xlu0
        %v1060 = vpop.trf.xlu0
        %v1061 = vpop.trf.xlu0
        %v1062 = vpop.trf.xlu0
        %v1063 = vpop.trf.xlu0
        %v1064 = vpop.trf.xlu0
        %1065 = vxpose.xlu0.b32.start [1/16] %v948, 128
        %1066 = vxpose.xlu0.b32.cont [2/16] 0.0, 128
        %1067 = vxpose.xlu0.b32.cont [3/16] 0.0, 128
        %1068 = vxpose.xlu0.b32.cont [4/16] 0.0, 128
        %1069 = vxpose.xlu0.b32.cont [5/16] 0.0, 128
        %1070 = vxpose.xlu0.b32.cont [6/16] 0.0, 128
        %1071 = vxpose.xlu0.b32.cont [7/16] 0.0, 128
        %1072 = vxpose.xlu0.b32.cont [8/16] 0.0, 128
        %1073 = vxpose.xlu0.b32.cont [9/16] 0.0, 128
        %1074 = vxpose.xlu0.b32.cont [10/16] 0.0, 128
        %1075 = vxpose.xlu0.b32.cont [11/16] 0.0, 128
        %1076 = vxpose.xlu0.b32.cont [12/16] 0.0, 128
        %1077 = vxpose.xlu0.b32.cont [13/16] 0.0, 128
        %1078 = vxpose.xlu0.b32.cont [14/16] 0.0, 128
        %1079 = vxpose.xlu0.b32.cont [15/16] 0.0, 128
        %1080 = vxpose.xlu0.b32.end [16/16] 0.0, 128
        %v1081 = vpop.trf.xlu0
        %v1082 = vpop.trf.xlu0
        %v1083 = vpop.trf.xlu0
        %v1084 = vpop.trf.xlu0
        %v1085 = vpop.trf.xlu0
        %v1086 = vpop.trf.xlu0
        %v1087 = vpop.trf.xlu0
        %v1088 = vpop.trf.xlu0
        %v1089 = vpop.trf.xlu0
        %v1090 = vpop.trf.xlu0
        %v1091 = vpop.trf.xlu0
        %v1092 = vpop.trf.xlu0
        %v1093 = vpop.trf.xlu0
        %v1094 = vpop.trf.xlu0
        %v1095 = vpop.trf.xlu0
        %v1096 = vpop.trf.xlu0
        %1097 = vxpose.xlu0.b32.start [1/16] %v988, 128
        %1098 = vxpose.xlu0.b32.cont [2/16] 0.0, 128
        %1099 = vxpose.xlu0.b32.cont [3/16] 0.0, 128
        %1100 = vxpose.xlu0.b32.cont [4/16] 0.0, 128
        %1101 = vxpose.xlu0.b32.cont [5/16] 0.0, 128
        %1102 = vxpose.xlu0.b32.cont [6/16] 0.0, 128
        %1103 = vxpose.xlu0.b32.cont [7/16] 0.0, 128
        %1104 = vxpose.xlu0.b32.cont [8/16] 0.0, 128
        %1105 = vxpose.xlu0.b32.cont [9/16] 0.0, 128
        %1106 = vxpose.xlu0.b32.cont [10/16] 0.0, 128
        %1107 = vxpose.xlu0.b32.cont [11/16] 0.0, 128
        %1108 = vxpose.xlu0.b32.cont [12/16] 0.0, 128
        %1109 = vxpose.xlu0.b32.cont [13/16] 0.0, 128
        %1110 = vxpose.xlu0.b32.cont [14/16] 0.0, 128
        %1111 = vxpose.xlu0.b32.cont [15/16] 0.0, 128
        %1112 = vxpose.xlu0.b32.end [16/16] 0.0, 128
        %v1113 = vpop.trf.xlu0
        %v1114 = vpop.trf.xlu0
        %v1115 = vpop.trf.xlu0
        %v1116 = vpop.trf.xlu0
        %v1117 = vpop.trf.xlu0
        %v1118 = vpop.trf.xlu0
        %v1119 = vpop.trf.xlu0
        %v1120 = vpop.trf.xlu0
        %v1121 = vpop.trf.xlu0
        %v1122 = vpop.trf.xlu0
        %v1123 = vpop.trf.xlu0
        %v1124 = vpop.trf.xlu0
        %v1125 = vpop.trf.xlu0
        %v1126 = vpop.trf.xlu0
        %v1127 = vpop.trf.xlu0
        %v1128 = vpop.trf.xlu0
        %1129 = vxpose.xlu0.b32.start [1/16] %v1028, 128
        %1130 = vxpose.xlu0.b32.cont [2/16] 0.0, 128
        %1131 = vxpose.xlu0.b32.cont [3/16] 0.0, 128
        %1132 = vxpose.xlu0.b32.cont [4/16] 0.0, 128
        %1133 = vxpose.xlu0.b32.cont [5/16] 0.0, 128
        %1134 = vxpose.xlu0.b32.cont [6/16] 0.0, 128
        %1135 = vxpose.xlu0.b32.cont [7/16] 0.0, 128
        %1136 = vxpose.xlu0.b32.cont [8/16] 0.0, 128
        %1137 = vxpose.xlu0.b32.cont [9/16] 0.0, 128
        %1138 = vxpose.xlu0.b32.cont [10/16] 0.0, 128
        %1139 = vxpose.xlu0.b32.cont [11/16] 0.0, 128
        %1140 = vxpose.xlu0.b32.cont [12/16] 0.0, 128
        %1141 = vxpose.xlu0.b32.cont [13/16] 0.0, 128
        %1142 = vxpose.xlu0.b32.cont [14/16] 0.0, 128
        %1143 = vxpose.xlu0.b32.cont [15/16] 0.0, 128
        %1144 = vxpose.xlu0.b32.end [16/16] 0.0, 128
        %v1145 = vpop.trf.xlu0
        %v1146 = vpop.trf.xlu0
        %v1147 = vpop.trf.xlu0
        %v1148 = vpop.trf.xlu0
        %v1149 = vpop.trf.xlu0
        %v1150 = vpop.trf.xlu0
        %v1151 = vpop.trf.xlu0
        %v1152 = vpop.trf.xlu0
        %v1153 = vpop.trf.xlu0
        %v1154 = vpop.trf.xlu0
        %v1155 = vpop.trf.xlu0
        %v1156 = vpop.trf.xlu0
        %v1157 = vpop.trf.xlu0
        %v1158 = vpop.trf.xlu0
        %v1159 = vpop.trf.xlu0
        %v1160 = vpop.trf.xlu0
        %vm1161 = vcmask 64512
        %v1162 = vsel %vm1161, %v908, -inf
        %1163 = vmax.xlane.f32.xlu0 %v1162
        %v1164 = vpop.xlane.xlu0 %1163
        %v1165 = vsel %vm1161, %v948, -inf
        %1166 = vmax.xlane.f32.xlu0 %v1165
        %v1167 = vpop.xlane.xlu0 %1166
        %v1168 = vsel %vm1161, %v988, -inf
        %1169 = vmax.xlane.f32.xlu0 %v1168
        %v1170 = vpop.xlane.xlu0 %1169
        %v1171 = vsel %vm1161, %v1028, -inf
        %1172 = vmax.xlane.f32.xlu0 %v1171
        %v1173 = vpop.xlane.xlu0 %1172
        %v1174 = vsub.f32 %v908, %v1164
        %v1175 = vsub.f32 %v948, %v1167
        %v1176 = vsub.f32 %v988, %v1170
        %v1177 = vsub.f32 %v1028, %v1173
        %v1178 = vmul.f32 %v1174, 1.442695
        %v1179 = vpow.pop %v1178
        %v1180 = vmul.f32 %v1175, 1.442695
        %v1181 = vpow.pop %v1180
        %v1182 = vmul.f32 %v1176, 1.442695
        %v1183 = vpow.pop %v1182
        %v1184 = vmul.f32 %v1177, 1.442695
        %v1185 = vpow.pop %v1184
        %v1186 = vsel %vm1161, %v1179, 0.0
        %1187 = vadd.xlane.f32.xlu0 %v1186
        %v1188 = vpop.xlane.xlu0 %1187
        %v1189 = vsel %vm1161, %v1181, 0.0
        %1190 = vadd.xlane.f32.xlu0 %v1189
        %v1191 = vpop.xlane.xlu0 %1190
        %v1192 = vsel %vm1161, %v1183, 0.0
        %1193 = vadd.xlane.f32.xlu0 %v1192
        %v1194 = vpop.xlane.xlu0 %1193
        %v1195 = vsel %vm1161, %v1185, 0.0
        %1196 = vadd.xlane.f32.xlu0 %v1195
        %v1197 = vpop.xlane.xlu0 %1196
        %v1198 = vrcp.pop %v1188
        %v1199 = vrcp.pop %v1191
        %v1200 = vrcp.pop %v1194
        %v1201 = vrcp.pop %v1197
        %v1202 = vmul.f32 %v1179, %v1198
        %v1203 = vmul.f32 %v1181, %v1199
        %v1204 = vmul.f32 %v1183, %v1200
        %v1205 = vmul.f32 %v1185, %v1201
        %v1206 = vpack.c.bf16 %v1202, %v1202
        %v1207 = vpack.c.bf16 %v1203, %v1203
        %v1208 = vpack.c.bf16 %v1204, %v1204
        %v1209 = vpack.c.bf16 %v1205, %v1205
        %v1211 = vsel %vm1161, %v1206, 0
        %vm1213 = vcmask 1043456
        %v1215 = vsel %vm1213, %v483, 0
        %1217 = vmatprep.subr.bf16.mxu0 0
        %1218 = vmatpush1.bf16.msra.mxu0 %v1215
        %1219 = vmatprep.subr.bf16.mxu0 0
        %1220 = vmatpush1.bf16.msra.mxu0 0
        %1221 = vmatprep.subr.bf16.mxu0 0
        %1222 = vmatpush1.bf16.msra.mxu0 0
        %1223 = vmatprep.subr.bf16.mxu0 0
        %1224 = vmatpush1.bf16.msra.mxu0 0
        %1225 = vmatprep.subr.bf16.mxu0 0
        %1226 = vmatpush1.bf16.msra.mxu0 0
        %1227 = vmatprep.subr.bf16.mxu0 0
        %1228 = vmatpush1.bf16.msra.mxu0 0
        %1229 = vmatprep.subr.bf16.mxu0 0
        %1230 = vmatpush1.bf16.msra.mxu0 0
        %1231 = vmatprep.subr.bf16.mxu0 0
        %1232 = vmatpush1.bf16.msra.mxu0 0
        %1233 = vmatprep.subr.bf16.mxu0 0
        %1234 = vmatpush1.bf16.msra.mxu0 0
        %1235 = vmatprep.subr.bf16.mxu0 0
        %1236 = vmatpush1.bf16.msra.mxu0 0
        %1237 = vmatprep.subr.bf16.mxu0 0
        %1238 = vmatpush1.bf16.msra.mxu0 0
        %1239 = vmatprep.subr.bf16.mxu0 0
        %1240 = vmatpush1.bf16.msra.mxu0 0
        %1241 = vmatprep.subr.bf16.mxu0 0
        %1242 = vmatpush1.bf16.msra.mxu0 0
        %1243 = vmatprep.subr.bf16.mxu0 0
        %1244 = vmatpush1.bf16.msra.mxu0 0
        %1245 = vmatprep.subr.bf16.mxu0 0
        %1246 = vmatpush1.bf16.msra.mxu0 0
        %1247 = vmatprep.subr.bf16.mxu0 0
        %1248 = vmatpush1.bf16.msra.mxu0 0
        %1249 = vmatprep.mubr.bf16.mxu0 0
        %1250 = vmatmul.mubr.bf16.gmra.mrb[0].mxu0 %v1211
        %v1251 = vpop.f32.mrb[0].mxu0
        %v1252 = vadd.f32 0.0, %v1251
        %v1253 = vpop.f32.mrb[0].mxu0
        %v1254 = vpop.f32.mrb[0].mxu0
        %v1255 = vpop.f32.mrb[0].mxu0
        %1256 = vdwg.mxu0
        %v1258 = vsel %vm1161, %v1207, 0
        %v1261 = vsel %vm1213, %v484, 0
        %1263 = vmatprep.subr.bf16.mxu0 0
        %1264 = vmatpush1.bf16.msra.mxu0 %v1261
        %1265 = vmatprep.subr.bf16.mxu0 0
        %1266 = vmatpush1.bf16.msra.mxu0 0
        %1267 = vmatprep.subr.bf16.mxu0 0
        %1268 = vmatpush1.bf16.msra.mxu0 0
        %1269 = vmatprep.subr.bf16.mxu0 0
        %1270 = vmatpush1.bf16.msra.mxu0 0
        %1271 = vmatprep.subr.bf16.mxu0 0
        %1272 = vmatpush1.bf16.msra.mxu0 0
        %1273 = vmatprep.subr.bf16.mxu0 0
        %1274 = vmatpush1.bf16.msra.mxu0 0
        %1275 = vmatprep.subr.bf16.mxu0 0
        %1276 = vmatpush1.bf16.msra.mxu0 0
        %1277 = vmatprep.subr.bf16.mxu0 0
        %1278 = vmatpush1.bf16.msra.mxu0 0
        %1279 = vmatprep.subr.bf16.mxu0 0
        %1280 = vmatpush1.bf16.msra.mxu0 0
        %1281 = vmatprep.subr.bf16.mxu0 0
        %1282 = vmatpush1.bf16.msra.mxu0 0
        %1283 = vmatprep.subr.bf16.mxu0 0
        %1284 = vmatpush1.bf16.msra.mxu0 0
        %1285 = vmatprep.subr.bf16.mxu0 0
        %1286 = vmatpush1.bf16.msra.mxu0 0
        %1287 = vmatprep.subr.bf16.mxu0 0
        %1288 = vmatpush1.bf16.msra.mxu0 0
        %1289 = vmatprep.subr.bf16.mxu0 0
        %1290 = vmatpush1.bf16.msra.mxu0 0
        %1291 = vmatprep.subr.bf16.mxu0 0
        %1292 = vmatpush1.bf16.msra.mxu0 0
        %1293 = vmatprep.subr.bf16.mxu0 0
        %1294 = vmatpush1.bf16.msra.mxu0 0
        %1295 = vmatprep.mubr.bf16.mxu0 0
        %1296 = vmatmul.mubr.bf16.gmra.mrb[0].mxu0 %v1258
        %v1297 = vpop.f32.mrb[0].mxu0
        %v1298 = vadd.f32 0.0, %v1297
        %v1299 = vpop.f32.mrb[0].mxu0
        %v1300 = vpop.f32.mrb[0].mxu0
        %v1301 = vpop.f32.mrb[0].mxu0
        %1302 = vdwg.mxu0
        %v1304 = vsel %vm1161, %v1208, 0
        %v1307 = vsel %vm1213, %v485, 0
        %1309 = vmatprep.subr.bf16.mxu0 0
        %1310 = vmatpush1.bf16.msra.mxu0 %v1307
        %1311 = vmatprep.subr.bf16.mxu0 0
        %1312 = vmatpush1.bf16.msra.mxu0 0
        %1313 = vmatprep.subr.bf16.mxu0 0
        %1314 = vmatpush1.bf16.msra.mxu0 0
        %1315 = vmatprep.subr.bf16.mxu0 0
        %1316 = vmatpush1.bf16.msra.mxu0 0
        %1317 = vmatprep.subr.bf16.mxu0 0
        %1318 = vmatpush1.bf16.msra.mxu0 0
        %1319 = vmatprep.subr.bf16.mxu0 0
        %1320 = vmatpush1.bf16.msra.mxu0 0
        %1321 = vmatprep.subr.bf16.mxu0 0
        %1322 = vmatpush1.bf16.msra.mxu0 0
        %1323 = vmatprep.subr.bf16.mxu0 0
        %1324 = vmatpush1.bf16.msra.mxu0 0
        %1325 = vmatprep.subr.bf16.mxu0 0
        %1326 = vmatpush1.bf16.msra.mxu0 0
        %1327 = vmatprep.subr.bf16.mxu0 0
        %1328 = vmatpush1.bf16.msra.mxu0 0
        %1329 = vmatprep.subr.bf16.mxu0 0
        %1330 = vmatpush1.bf16.msra.mxu0 0
        %1331 = vmatprep.subr.bf16.mxu0 0
        %1332 = vmatpush1.bf16.msra.mxu0 0
        %1333 = vmatprep.subr.bf16.mxu0 0
        %1334 = vmatpush1.bf16.msra.mxu0 0
        %1335 = vmatprep.subr.bf16.mxu0 0
        %1336 = vmatpush1.bf16.msra.mxu0 0
        %1337 = vmatprep.subr.bf16.mxu0 0
        %1338 = vmatpush1.bf16.msra.mxu0 0
        %1339 = vmatprep.subr.bf16.mxu0 0
        %1340 = vmatpush1.bf16.msra.mxu0 0
        %1341 = vmatprep.mubr.bf16.mxu0 0
        %1342 = vmatmul.mubr.bf16.gmra.mrb[0].mxu0 %v1304
        %v1343 = vpop.f32.mrb[0].mxu0
        %v1344 = vadd.f32 0.0, %v1343
        %v1345 = vpop.f32.mrb[0].mxu0
        %v1346 = vpop.f32.mrb[0].mxu0
        %v1347 = vpop.f32.mrb[0].mxu0
        %1348 = vdwg.mxu0
        %v1350 = vsel %vm1161, %v1209, 0
        %v1353 = vsel %vm1213, %v486, 0
        %1355 = vmatprep.subr.bf16.mxu0 0
        %1356 = vmatpush1.bf16.msra.mxu0 %v1353
        %1357 = vmatprep.subr.bf16.mxu0 0
        %1358 = vmatpush1.bf16.msra.mxu0 0
        %1359 = vmatprep.subr.bf16.mxu0 0
        %1360 = vmatpush1.bf16.msra.mxu0 0
        %1361 = vmatprep.subr.bf16.mxu0 0
        %1362 = vmatpush1.bf16.msra.mxu0 0
        %1363 = vmatprep.subr.bf16.mxu0 0
        %1364 = vmatpush1.bf16.msra.mxu0 0
        %1365 = vmatprep.subr.bf16.mxu0 0
        %1366 = vmatpush1.bf16.msra.mxu0 0
        %1367 = vmatprep.subr.bf16.mxu0 0
        %1368 = vmatpush1.bf16.msra.mxu0 0
        %1369 = vmatprep.subr.bf16.mxu0 0
        %1370 = vmatpush1.bf16.msra.mxu0 0
        %1371 = vmatprep.subr.bf16.mxu0 0
        %1372 = vmatpush1.bf16.msra.mxu0 0
        %1373 = vmatprep.subr.bf16.mxu0 0
        %1374 = vmatpush1.bf16.msra.mxu0 0
        %1375 = vmatprep.subr.bf16.mxu0 0
        %1376 = vmatpush1.bf16.msra.mxu0 0
        %1377 = vmatprep.subr.bf16.mxu0 0
        %1378 = vmatpush1.bf16.msra.mxu0 0
        %1379 = vmatprep.subr.bf16.mxu0 0
        %1380 = vmatpush1.bf16.msra.mxu0 0
        %1381 = vmatprep.subr.bf16.mxu0 0
        %1382 = vmatpush1.bf16.msra.mxu0 0
        %1383 = vmatprep.subr.bf16.mxu0 0
        %1384 = vmatpush1.bf16.msra.mxu0 0
        %1385 = vmatprep.subr.bf16.mxu0 0
        %1386 = vmatpush1.bf16.msra.mxu0 0
        %1387 = vmatprep.mubr.bf16.mxu0 0
        %1388 = vmatmul.mubr.bf16.gmra.mrb[0].mxu0 %v1350
        %v1389 = vpop.f32.mrb[0].mxu0
        %v1390 = vadd.f32 0.0, %v1389
        %v1391 = vpop.f32.mrb[0].mxu0
        %v1392 = vpop.f32.mrb[0].mxu0
        %v1393 = vpop.f32.mrb[0].mxu0
        %1394 = vdwg.mxu0
        %v1395 = vsel %vm1161, %v1049, -inf
        %1396 = vmax.xlane.f32.xlu0 %v1395
        %v1397 = vpop.xlane.xlu0 %1396
        %v1398 = vsel %vm1161, %v1081, -inf
        %1399 = vmax.xlane.f32.xlu0 %v1398
        %v1400 = vpop.xlane.xlu0 %1399
        %v1401 = vsel %vm1161, %v1113, -inf
        %1402 = vmax.xlane.f32.xlu0 %v1401
        %v1403 = vpop.xlane.xlu0 %1402
        %v1404 = vsel %vm1161, %v1145, -inf
        %1405 = vmax.xlane.f32.xlu0 %v1404
        %v1406 = vpop.xlane.xlu0 %1405
        %v1407 = vsub.f32 %v1049, %v1397
        %v1408 = vsub.f32 %v1081, %v1400
        %v1409 = vsub.f32 %v1113, %v1403
        %v1410 = vsub.f32 %v1145, %v1406
        %v1411 = vmul.f32 %v1407, 1.442695
        %v1412 = vpow.pop %v1411
        %v1413 = vmul.f32 %v1408, 1.442695
        %v1414 = vpow.pop %v1413
        %v1415 = vmul.f32 %v1409, 1.442695
        %v1416 = vpow.pop %v1415
        %v1417 = vmul.f32 %v1410, 1.442695
        %v1418 = vpow.pop %v1417
        %v1419 = vsel %vm1161, %v1412, 0.0
        %1420 = vadd.xlane.f32.xlu0 %v1419
        %v1421 = vpop.xlane.xlu0 %1420
        %v1422 = vsel %vm1161, %v1414, 0.0
        %1423 = vadd.xlane.f32.xlu0 %v1422
        %v1424 = vpop.xlane.xlu0 %1423
        %v1425 = vsel %vm1161, %v1416, 0.0
        %1426 = vadd.xlane.f32.xlu0 %v1425
        %v1427 = vpop.xlane.xlu0 %1426
        %v1428 = vsel %vm1161, %v1418, 0.0
        %1429 = vadd.xlane.f32.xlu0 %v1428
        %v1430 = vpop.xlane.xlu0 %1429
        %v1431 = vrcp.pop %v1421
        %v1432 = vrcp.pop %v1424
        %v1433 = vrcp.pop %v1427
        %v1434 = vrcp.pop %v1430
        %v1435 = vmul.f32 %v1412, %v1431
        %v1436 = vmul.f32 %v1414, %v1432
        %v1437 = vmul.f32 %v1416, %v1433
        %v1438 = vmul.f32 %v1418, %v1434
        %v1439 = vpack.c.bf16 %v1435, %v1435
        %v1440 = vpack.c.bf16 %v1436, %v1436
        %v1441 = vpack.c.bf16 %v1437, %v1437
        %v1442 = vpack.c.bf16 %v1438, %v1438
        %v1444 = vsel %vm1161, %v1439, 0
        %v1447 = vsel %vm1213, %v479, 0
        %1449 = vmatprep.subr.bf16.mxu0 0
        %1450 = vmatpush1.bf16.msra.mxu0 %v1447
        %1451 = vmatprep.subr.bf16.mxu0 0
        %1452 = vmatpush1.bf16.msra.mxu0 0
        %1453 = vmatprep.subr.bf16.mxu0 0
        %1454 = vmatpush1.bf16.msra.mxu0 0
        %1455 = vmatprep.subr.bf16.mxu0 0
        %1456 = vmatpush1.bf16.msra.mxu0 0
        %1457 = vmatprep.subr.bf16.mxu0 0
        %1458 = vmatpush1.bf16.msra.mxu0 0
        %1459 = vmatprep.subr.bf16.mxu0 0
        %1460 = vmatpush1.bf16.msra.mxu0 0
        %1461 = vmatprep.subr.bf16.mxu0 0
        %1462 = vmatpush1.bf16.msra.mxu0 0
        %1463 = vmatprep.subr.bf16.mxu0 0
        %1464 = vmatpush1.bf16.msra.mxu0 0
        %1465 = vmatprep.subr.bf16.mxu0 0
        %1466 = vmatpush1.bf16.msra.mxu0 0
        %1467 = vmatprep.subr.bf16.mxu0 0
        %1468 = vmatpush1.bf16.msra.mxu0 0
        %1469 = vmatprep.subr.bf16.mxu0 0
        %1470 = vmatpush1.bf16.msra.mxu0 0
        %1471 = vmatprep.subr.bf16.mxu0 0
        %1472 = vmatpush1.bf16.msra.mxu0 0
        %1473 = vmatprep.subr.bf16.mxu0 0
        %1474 = vmatpush1.bf16.msra.mxu0 0
        %1475 = vmatprep.subr.bf16.mxu0 0
        %1476 = vmatpush1.bf16.msra.mxu0 0
        %1477 = vmatprep.subr.bf16.mxu0 0
        %1478 = vmatpush1.bf16.msra.mxu0 0
        %1479 = vmatprep.subr.bf16.mxu0 0
        %1480 = vmatpush1.bf16.msra.mxu0 0
        %1481 = vmatprep.mubr.bf16.mxu0 0
        %1482 = vmatmul.mubr.bf16.gmra.mrb[0].mxu0 %v1444
        %v1483 = vpop.f32.mrb[0].mxu0
        %v1484 = vadd.f32 0.0, %v1483
        %v1485 = vpop.f32.mrb[0].mxu0
        %v1486 = vpop.f32.mrb[0].mxu0
        %v1487 = vpop.f32.mrb[0].mxu0
        %1488 = vdwg.mxu0
        %v1490 = vsel %vm1161, %v1440, 0
        %v1493 = vsel %vm1213, %v480, 0
        %1495 = vmatprep.subr.bf16.mxu0 0
        %1496 = vmatpush1.bf16.msra.mxu0 %v1493
        %1497 = vmatprep.subr.bf16.mxu0 0
        %1498 = vmatpush1.bf16.msra.mxu0 0
        %1499 = vmatprep.subr.bf16.mxu0 0
        %1500 = vmatpush1.bf16.msra.mxu0 0
        %1501 = vmatprep.subr.bf16.mxu0 0
        %1502 = vmatpush1.bf16.msra.mxu0 0
        %1503 = vmatprep.subr.bf16.mxu0 0
        %1504 = vmatpush1.bf16.msra.mxu0 0
        %1505 = vmatprep.subr.bf16.mxu0 0
        %1506 = vmatpush1.bf16.msra.mxu0 0
        %1507 = vmatprep.subr.bf16.mxu0 0
        %1508 = vmatpush1.bf16.msra.mxu0 0
        %1509 = vmatprep.subr.bf16.mxu0 0
        %1510 = vmatpush1.bf16.msra.mxu0 0
        %1511 = vmatprep.subr.bf16.mxu0 0
        %1512 = vmatpush1.bf16.msra.mxu0 0
        %1513 = vmatprep.subr.bf16.mxu0 0
        %1514 = vmatpush1.bf16.msra.mxu0 0
        %1515 = vmatprep.subr.bf16.mxu0 0
        %1516 = vmatpush1.bf16.msra.mxu0 0
        %1517 = vmatprep.subr.bf16.mxu0 0
        %1518 = vmatpush1.bf16.msra.mxu0 0
        %1519 = vmatprep.subr.bf16.mxu0 0
        %1520 = vmatpush1.bf16.msra.mxu0 0
        %1521 = vmatprep.subr.bf16.mxu0 0
        %1522 = vmatpush1.bf16.msra.mxu0 0
        %1523 = vmatprep.subr.bf16.mxu0 0
        %1524 = vmatpush1.bf16.msra.mxu0 0
        %1525 = vmatprep.subr.bf16.mxu0 0
        %1526 = vmatpush1.bf16.msra.mxu0 0
        %1527 = vmatprep.mubr.bf16.mxu0 0
        %1528 = vmatmul.mubr.bf16.gmra.mrb[0].mxu0 %v1490
        %v1529 = vpop.f32.mrb[0].mxu0
        %v1530 = vadd.f32 0.0, %v1529
        %v1531 = vpop.f32.mrb[0].mxu0
        %v1532 = vpop.f32.mrb[0].mxu0
        %v1533 = vpop.f32.mrb[0].mxu0
        %1534 = vdwg.mxu0
        %v1536 = vsel %vm1161, %v1441, 0
        %v1539 = vsel %vm1213, %v481, 0
        %1541 = vmatprep.subr.bf16.mxu0 0
        %1542 = vmatpush1.bf16.msra.mxu0 %v1539
        %1543 = vmatprep.subr.bf16.mxu0 0
        %1544 = vmatpush1.bf16.msra.mxu0 0
        %1545 = vmatprep.subr.bf16.mxu0 0
        %1546 = vmatpush1.bf16.msra.mxu0 0
        %1547 = vmatprep.subr.bf16.mxu0 0
        %1548 = vmatpush1.bf16.msra.mxu0 0
        %1549 = vmatprep.subr.bf16.mxu0 0
        %1550 = vmatpush1.bf16.msra.mxu0 0
        %1551 = vmatprep.subr.bf16.mxu0 0
        %1552 = vmatpush1.bf16.msra.mxu0 0
        %1553 = vmatprep.subr.bf16.mxu0 0
        %1554 = vmatpush1.bf16.msra.mxu0 0
        %1555 = vmatprep.subr.bf16.mxu0 0
        %1556 = vmatpush1.bf16.msra.mxu0 0
        %1557 = vmatprep.subr.bf16.mxu0 0
        %1558 = vmatpush1.bf16.msra.mxu0 0
        %1559 = vmatprep.subr.bf16.mxu0 0
        %1560 = vmatpush1.bf16.msra.mxu0 0
        %1561 = vmatprep.subr.bf16.mxu0 0
        %1562 = vmatpush1.bf16.msra.mxu0 0
        %1563 = vmatprep.subr.bf16.mxu0 0
        %1564 = vmatpush1.bf16.msra.mxu0 0
        %1565 = vmatprep.subr.bf16.mxu0 0
        %1566 = vmatpush1.bf16.msra.mxu0 0
        %1567 = vmatprep.subr.bf16.mxu0 0
        %1568 = vmatpush1.bf16.msra.mxu0 0
        %1569 = vmatprep.subr.bf16.mxu0 0
        %1570 = vmatpush1.bf16.msra.mxu0 0
        %1571 = vmatprep.subr.bf16.mxu0 0
        %1572 = vmatpush1.bf16.msra.mxu0 0
        %1573 = vmatprep.mubr.bf16.mxu0 0
        %1574 = vmatmul.mubr.bf16.gmra.mrb[0].mxu0 %v1536
        %v1575 = vpop.f32.mrb[0].mxu0
        %v1576 = vadd.f32 0.0, %v1575
        %v1577 = vpop.f32.mrb[0].mxu0
        %v1578 = vpop.f32.mrb[0].mxu0
        %v1579 = vpop.f32.mrb[0].mxu0
        %1580 = vdwg.mxu0
        %v1582 = vsel %vm1161, %v1442, 0
        %v1585 = vsel %vm1213, %v482, 0
        %1587 = vmatprep.subr.bf16.mxu0 0
        %1588 = vmatpush1.bf16.msra.mxu0 %v1585
        %1589 = vmatprep.subr.bf16.mxu0 0
        %1590 = vmatpush1.bf16.msra.mxu0 0
        %1591 = vmatprep.subr.bf16.mxu0 0
        %1592 = vmatpush1.bf16.msra.mxu0 0
        %1593 = vmatprep.subr.bf16.mxu0 0
        %1594 = vmatpush1.bf16.msra.mxu0 0
        %1595 = vmatprep.subr.bf16.mxu0 0
        %1596 = vmatpush1.bf16.msra.mxu0 0
        %1597 = vmatprep.subr.bf16.mxu0 0
        %1598 = vmatpush1.bf16.msra.mxu0 0
        %1599 = vmatprep.subr.bf16.mxu0 0
        %1600 = vmatpush1.bf16.msra.mxu0 0
        %1601 = vmatprep.subr.bf16.mxu0 0
        %1602 = vmatpush1.bf16.msra.mxu0 0
        %1603 = vmatprep.subr.bf16.mxu0 0
        %1604 = vmatpush1.bf16.msra.mxu0 0
        %1605 = vmatprep.subr.bf16.mxu0 0
        %1606 = vmatpush1.bf16.msra.mxu0 0
        %1607 = vmatprep.subr.bf16.mxu0 0
        %1608 = vmatpush1.bf16.msra.mxu0 0
        %1609 = vmatprep.subr.bf16.mxu0 0
        %1610 = vmatpush1.bf16.msra.mxu0 0
        %1611 = vmatprep.subr.bf16.mxu0 0
        %1612 = vmatpush1.bf16.msra.mxu0 0
        %1613 = vmatprep.subr.bf16.mxu0 0
        %1614 = vmatpush1.bf16.msra.mxu0 0
        %1615 = vmatprep.subr.bf16.mxu0 0
        %1616 = vmatpush1.bf16.msra.mxu0 0
        %1617 = vmatprep.subr.bf16.mxu0 0
        %1618 = vmatpush1.bf16.msra.mxu0 0
        %1619 = vmatprep.mubr.bf16.mxu0 0
        %1620 = vmatmul.mubr.bf16.gmra.mrb[0].mxu0 %v1582
        %v1621 = vpop.f32.mrb[0].mxu0
        %v1622 = vadd.f32 0.0, %v1621
        %v1623 = vpop.f32.mrb[0].mxu0
        %v1624 = vpop.f32.mrb[0].mxu0
        %v1625 = vpop.f32.mrb[0].mxu0
        %1626 = vdwg.mxu0
        %v1627 = vld [vmem:[#allocation8] sm:$0xf]
        %v1628 = vld [vmem:[#allocation8 + $0x4] sm:$0xf]
        %v1629 = vld [vmem:[#allocation8 + $0x8] sm:$0xf]
        %v1630 = vld [vmem:[#allocation8 + $0xc] sm:$0xf]
        %v1631 = vld [vmem:[#allocation8 + $0x10] sm:$0xf]
        %v1632 = vld [vmem:[#allocation8 + $0x14] sm:$0xf]
        %v1633 = vld [vmem:[#allocation8 + $0x18] sm:$0xf]
        %v1634 = vld [vmem:[#allocation8 + $0x1c] sm:$0xf]
        %v1635 = vld [vmem:[#allocation8 + $0x20] sm:$0xf]
        %v1636 = vld [vmem:[#allocation8 + $0x24] sm:$0xf]
        %v1637 = vld [vmem:[#allocation8 + $0x28] sm:$0xf]
        %v1638 = vld [vmem:[#allocation8 + $0x2c] sm:$0xf]
        %v1639 = vld [vmem:[#allocation8 + $0x30] sm:$0xf]
        %v1640 = vld [vmem:[#allocation8 + $0x34] sm:$0xf]
        %v1641 = vld [vmem:[#allocation8 + $0x38] sm:$0xf]
        %v1642 = vld [vmem:[#allocation8 + $0x3c] sm:$0xf]
        %v1643 = vld [vmem:[#allocation8 + $0x40] sm:$0xf]
        %v1644 = vld [vmem:[#allocation8 + $0x44] sm:$0xf]
        %v1645 = vld [vmem:[#allocation8 + $0x48] sm:$0xf]
        %v1646 = vld [vmem:[#allocation8 + $0x4c] sm:$0xf]
        %v1647 = vld [vmem:[#allocation8 + $0x50] sm:$0xf]
        %v1648 = vld [vmem:[#allocation8 + $0x54] sm:$0xf]
        %v1649 = vld [vmem:[#allocation8 + $0x58] sm:$0xf]
        %v1650 = vld [vmem:[#allocation8 + $0x5c] sm:$0xf]
        %v1651 = vld [vmem:[#allocation8 + $0x60] sm:$0xf]
        %v1652 = vld [vmem:[#allocation8 + $0x64] sm:$0xf]
        %v1653 = vld [vmem:[#allocation8 + $0x68] sm:$0xf]
        %v1654 = vld [vmem:[#allocation8 + $0x6c] sm:$0xf]
        %v1655 = vld [vmem:[#allocation8 + $0x70] sm:$0xf]
        %v1656 = vld [vmem:[#allocation8 + $0x74] sm:$0xf]
        %v1657 = vld [vmem:[#allocation8 + $0x78] sm:$0xf]
        %v1658 = vld [vmem:[#allocation8 + $0x7c] sm:$0xf]
        %v1659 = vld [vmem:[#allocation8 + $0x80] sm:$0xf]
        %v1660 = vld [vmem:[#allocation8 + $0x84] sm:$0xf]
        %v1661 = vld [vmem:[#allocation8 + $0x88] sm:$0xf]
        %v1662 = vld [vmem:[#allocation8 + $0x8c] sm:$0xf]
        %v1663 = vld [vmem:[#allocation8 + $0x90] sm:$0xf]
        %v1664 = vld [vmem:[#allocation8 + $0x94] sm:$0xf]
        %v1665 = vld [vmem:[#allocation8 + $0x98] sm:$0xf]
        %v1666 = vld [vmem:[#allocation8 + $0x9c] sm:$0xf]
        %v1667 = vld [vmem:[#allocation8 + $0xa0] sm:$0xf]
        %v1668 = vld [vmem:[#allocation8 + $0xa4] sm:$0xf]
        %v1669 = vld [vmem:[#allocation8 + $0xa8] sm:$0xf]
        %v1670 = vld [vmem:[#allocation8 + $0xac] sm:$0xf]
        %v1671 = vld [vmem:[#allocation8 + $0xb0] sm:$0xf]
        %v1672 = vld [vmem:[#allocation8 + $0xb4] sm:$0xf]
        %v1673 = vld [vmem:[#allocation8 + $0xb8] sm:$0xf]
        %v1674 = vld [vmem:[#allocation8 + $0xbc] sm:$0xf]
        %v1675 = vld [vmem:[%s5] sm:$0x1]
        %v1676 = vld [vmem:[%s5 + $0x1] sm:$0x1]
        %v1677 = vpack.c.bf16 %v1298, %v1252
        %v1678 = vpack.c.bf16 %v1390, %v1344
        %v1695 = vunpack.c.l.b16 %v1643
        %v1696 = vunpack.c.l.b16 %v1644
        %v1697 = vunpack.c.l.b16 %v1645
        %v1698 = vunpack.c.l.b16 %v1646
        %v1699 = vunpack.c.l.b16 %v1647
        %v1700 = vunpack.c.l.b16 %v1648
        %v1701 = vunpack.c.l.b16 %v1649
        %v1702 = vunpack.c.l.b16 %v1650
        %v1703 = vunpack.c.l.b16 %v1651
        %v1704 = vunpack.c.l.b16 %v1652
        %v1705 = vunpack.c.l.b16 %v1653
        %v1706 = vunpack.c.l.b16 %v1654
        %v1707 = vunpack.c.l.b16 %v1655
        %v1708 = vunpack.c.l.b16 %v1656
        %v1709 = vunpack.c.l.b16 %v1657
        %v1710 = vunpack.c.l.b16 %v1658
        %v1711 = vpack.c.b16 %v1696, %v1695
        %v1712 = vpack.c.b16 %v1698, %v1697
        %v1713 = vpack.c.b16 %v1700, %v1699
        %v1714 = vpack.c.b16 %v1702, %v1701
        %v1715 = vpack.c.b16 %v1704, %v1703
        %v1716 = vpack.c.b16 %v1706, %v1705
        %v1717 = vpack.c.b16 %v1708, %v1707
        %v1718 = vpack.c.b16 %v1710, %v1709
        %1727 = vmatprep.subr.bf16.mxu0 0
        %1728 = vmatpush1.bf16.msra.mxu0 %v1711
        %1729 = vmatprep.subr.bf16.mxu0 0
        %1730 = vmatpush1.bf16.msra.mxu0 %v1712
        %1731 = vmatprep.subr.bf16.mxu0 0
        %1732 = vmatpush1.bf16.msra.mxu0 %v1713
        %1733 = vmatprep.subr.bf16.mxu0 0
        %1734 = vmatpush1.bf16.msra.mxu0 %v1714
        %1735 = vmatprep.subr.bf16.mxu0 0
        %1736 = vmatpush1.bf16.msra.mxu0 %v1715
        %1737 = vmatprep.subr.bf16.mxu0 0
        %1738 = vmatpush1.bf16.msra.mxu0 %v1716
        %1739 = vmatprep.subr.bf16.mxu0 0
        %1740 = vmatpush1.bf16.msra.mxu0 %v1717
        %1741 = vmatprep.subr.bf16.mxu0 0
        %1742 = vmatpush1.bf16.msra.mxu0 %v1718
        %1743 = vmatprep.subr.bf16.mxu0 0
        %1744 = vmatpush1.bf16.msra.mxu0 0
        %1745 = vmatprep.subr.bf16.mxu0 0
        %1746 = vmatpush1.bf16.msra.mxu0 0
        %1747 = vmatprep.subr.bf16.mxu0 0
        %1748 = vmatpush1.bf16.msra.mxu0 0
        %1749 = vmatprep.subr.bf16.mxu0 0
        %1750 = vmatpush1.bf16.msra.mxu0 0
        %1751 = vmatprep.subr.bf16.mxu0 0
        %1752 = vmatpush1.bf16.msra.mxu0 0
        %1753 = vmatprep.subr.bf16.mxu0 0
        %1754 = vmatpush1.bf16.msra.mxu0 0
        %1755 = vmatprep.subr.bf16.mxu0 0
        %1756 = vmatpush1.bf16.msra.mxu0 0
        %1757 = vmatprep.subr.bf16.mxu0 0
        %1758 = vmatpush1.bf16.msra.mxu0 0
        %1759 = vmatprep.mubr.bf16.mxu0 0
        %1760 = vmatmul.mubr.bf16.gmra.mrb[0].mxu0 %v1677
        %v1761 = vpop.f32.mrb[0].mxu0
        %v1762 = vadd.f32 0.0, %v1761
        %v1763 = vpop.f32.mrb[0].mxu0
        %v1764 = vpop.f32.mrb[0].mxu0
        %v1765 = vadd.f32 0.0, %v1764
        %v1766 = vpop.f32.mrb[0].mxu0
        %1767 = vmatprep.mubr.bf16.mxu0 0
        %1768 = vmatmul.mubr.bf16.gmra.mrb[0].mxu0 %v1678
        %v1769 = vpop.f32.mrb[0].mxu0
        %v1770 = vadd.f32 0.0, %v1769
        %v1771 = vpop.f32.mrb[0].mxu0
        %v1772 = vpop.f32.mrb[0].mxu0
        %v1773 = vadd.f32 0.0, %v1772
        %v1774 = vpop.f32.mrb[0].mxu0
        %1775 = vdwg.mxu0
        %v1792 = vunpack.c.l.b16 %v1627
        %v1793 = vunpack.c.l.b16 %v1628
        %v1794 = vunpack.c.l.b16 %v1629
        %v1795 = vunpack.c.l.b16 %v1630
        %v1796 = vunpack.c.l.b16 %v1631
        %v1797 = vunpack.c.l.b16 %v1632
        %v1798 = vunpack.c.l.b16 %v1633
        %v1799 = vunpack.c.l.b16 %v1634
        %v1800 = vunpack.c.l.b16 %v1635
        %v1801 = vunpack.c.l.b16 %v1636
        %v1802 = vunpack.c.l.b16 %v1637
        %v1803 = vunpack.c.l.b16 %v1638
        %v1804 = vunpack.c.l.b16 %v1639
        %v1805 = vunpack.c.l.b16 %v1640
        %v1806 = vunpack.c.l.b16 %v1641
        %v1807 = vunpack.c.l.b16 %v1642
        %v1808 = vpack.c.b16 %v1793, %v1792
        %v1809 = vpack.c.b16 %v1795, %v1794
        %v1810 = vpack.c.b16 %v1797, %v1796
        %v1811 = vpack.c.b16 %v1799, %v1798
        %v1812 = vpack.c.b16 %v1801, %v1800
        %v1813 = vpack.c.b16 %v1803, %v1802
        %v1814 = vpack.c.b16 %v1805, %v1804
        %v1815 = vpack.c.b16 %v1807, %v1806
        %1824 = vmatprep.subr.bf16.mxu0 0
        %1825 = vmatpush1.bf16.msra.mxu0 %v1808
        %1826 = vmatprep.subr.bf16.mxu0 0
        %1827 = vmatpush1.bf16.msra.mxu0 %v1809
        %1828 = vmatprep.subr.bf16.mxu0 0
        %1829 = vmatpush1.bf16.msra.mxu0 %v1810
        %1830 = vmatprep.subr.bf16.mxu0 0
        %1831 = vmatpush1.bf16.msra.mxu0 %v1811
        %1832 = vmatprep.subr.bf16.mxu0 0
        %1833 = vmatpush1.bf16.msra.mxu0 %v1812
        %1834 = vmatprep.subr.bf16.mxu0 0
        %1835 = vmatpush1.bf16.msra.mxu0 %v1813
        %1836 = vmatprep.subr.bf16.mxu0 0
        %1837 = vmatpush1.bf16.msra.mxu0 %v1814
        %1838 = vmatprep.subr.bf16.mxu0 0
        %1839 = vmatpush1.bf16.msra.mxu0 %v1815
        %1840 = vmatprep.subr.bf16.mxu0 0
        %1841 = vmatpush1.bf16.msra.mxu0 0
        %1842 = vmatprep.subr.bf16.mxu0 0
        %1843 = vmatpush1.bf16.msra.mxu0 0
        %1844 = vmatprep.subr.bf16.mxu0 0
        %1845 = vmatpush1.bf16.msra.mxu0 0
        %1846 = vmatprep.subr.bf16.mxu0 0
        %1847 = vmatpush1.bf16.msra.mxu0 0
        %1848 = vmatprep.subr.bf16.mxu0 0
        %1849 = vmatpush1.bf16.msra.mxu0 0
        %1850 = vmatprep.subr.bf16.mxu0 0
        %1851 = vmatpush1.bf16.msra.mxu0 0
        %1852 = vmatprep.subr.bf16.mxu0 0
        %1853 = vmatpush1.bf16.msra.mxu0 0
        %1854 = vmatprep.subr.bf16.mxu0 0
        %1855 = vmatpush1.bf16.msra.mxu0 0
        %1856 = vmatprep.mubr.bf16.mxu0 0
        %1857 = vmatmul.mubr.bf16.gmra.mrb[0].mxu0 %v533
        %v1858 = vpop.f32.mrb[0].mxu0
        %v1859 = vadd.f32 %v1762, %v1858
        %v1860 = vpop.f32.mrb[0].mxu0
        %v1861 = vpop.f32.mrb[0].mxu0
        %v1862 = vadd.f32 %v1765, %v1861
        %v1863 = vpop.f32.mrb[0].mxu0
        %1864 = vmatprep.mubr.bf16.mxu0 0
        %1865 = vmatmul.mubr.bf16.gmra.mrb[0].mxu0 %v534
        %v1866 = vpop.f32.mrb[0].mxu0
        %v1867 = vadd.f32 %v1770, %v1866
        %v1868 = vpop.f32.mrb[0].mxu0
        %v1869 = vpop.f32.mrb[0].mxu0
        %v1870 = vadd.f32 %v1773, %v1869
        %v1871 = vpop.f32.mrb[0].mxu0
        %1872 = vdwg.mxu0
        %v1873 = vlaneseq
        %v1874 = vshrl.u32 %v1873, 7
        %v1875 = vsub.s32 0, %v1874
        %v1876 = vrot.slane %v1675, %v1875
        %v1877 = vadd.f32 %v1859, %v1876
        %v1878 = vadd.f32 %v1862, %v1876
        %v1879 = vadd.f32 %v1867, %v1876
        %v1880 = vadd.f32 %v1870, %v1876
        %v1881 = vmax.f32 %v1877, 0.0
        %v1882 = vmax.f32 %v1878, 0.0
        %v1883 = vmax.f32 %v1879, 0.0
        %v1884 = vmax.f32 %v1880, 0.0
        %v1885 = vpack.c.bf16 %v1530, %v1484
        %v1886 = vpack.c.bf16 %v1622, %v1576
        %1887 = vmatprep.subr.bf16.mxu0 0
        %1888 = vmatpush1.bf16.msra.mxu0 %v1711
        %1889 = vmatprep.subr.bf16.mxu0 0
        %1890 = vmatpush1.bf16.msra.mxu0 %v1712
        %1891 = vmatprep.subr.bf16.mxu0 0
        %1892 = vmatpush1.bf16.msra.mxu0 %v1713
        %1893 = vmatprep.subr.bf16.mxu0 0
        %1894 = vmatpush1.bf16.msra.mxu0 %v1714
        %1895 = vmatprep.subr.bf16.mxu0 0
        %1896 = vmatpush1.bf16.msra.mxu0 %v1715
        %1897 = vmatprep.subr.bf16.mxu0 0
        %1898 = vmatpush1.bf16.msra.mxu0 %v1716
        %1899 = vmatprep.subr.bf16.mxu0 0
        %1900 = vmatpush1.bf16.msra.mxu0 %v1717
        %1901 = vmatprep.subr.bf16.mxu0 0
        %1902 = vmatpush1.bf16.msra.mxu0 %v1718
        %1903 = vmatprep.subr.bf16.mxu0 0
        %1904 = vmatpush1.bf16.msra.mxu0 0
        %1905 = vmatprep.subr.bf16.mxu0 0
        %1906 = vmatpush1.bf16.msra.mxu0 0
        %1907 = vmatprep.subr.bf16.mxu0 0
        %1908 = vmatpush1.bf16.msra.mxu0 0
        %1909 = vmatprep.subr.bf16.mxu0 0
        %1910 = vmatpush1.bf16.msra.mxu0 0
        %1911 = vmatprep.subr.bf16.mxu0 0
        %1912 = vmatpush1.bf16.msra.mxu0 0
        %1913 = vmatprep.subr.bf16.mxu0 0
        %1914 = vmatpush1.bf16.msra.mxu0 0
        %1915 = vmatprep.subr.bf16.mxu0 0
        %1916 = vmatpush1.bf16.msra.mxu0 0
        %1917 = vmatprep.subr.bf16.mxu0 0
        %1918 = vmatpush1.bf16.msra.mxu0 0
        %1919 = vmatprep.mubr.bf16.mxu0 0
        %1920 = vmatmul.mubr.bf16.gmra.mrb[0].mxu0 %v1885
        %v1921 = vpop.f32.mrb[0].mxu0
        %v1922 = vadd.f32 0.0, %v1921
        %v1923 = vpop.f32.mrb[0].mxu0
        %v1924 = vpop.f32.mrb[0].mxu0
        %v1925 = vadd.f32 0.0, %v1924
        %v1926 = vpop.f32.mrb[0].mxu0
        %1927 = vmatprep.mubr.bf16.mxu0 0
        %1928 = vmatmul.mubr.bf16.gmra.mrb[0].mxu0 %v1886
        %v1929 = vpop.f32.mrb[0].mxu0
        %v1930 = vadd.f32 0.0, %v1929
        %v1931 = vpop.f32.mrb[0].mxu0
        %v1932 = vpop.f32.mrb[0].mxu0
        %v1933 = vadd.f32 0.0, %v1932
        %v1934 = vpop.f32.mrb[0].mxu0
        %1935 = vdwg.mxu0
        %1936 = vmatprep.subr.bf16.mxu0 0
        %1937 = vmatpush1.bf16.msra.mxu0 %v1808
        %1938 = vmatprep.subr.bf16.mxu0 0
        %1939 = vmatpush1.bf16.msra.mxu0 %v1809
        %1940 = vmatprep.subr.bf16.mxu0 0
        %1941 = vmatpush1.bf16.msra.mxu0 %v1810
        %1942 = vmatprep.subr.bf16.mxu0 0
        %1943 = vmatpush1.bf16.msra.mxu0 %v1811
        %1944 = vmatprep.subr.bf16.mxu0 0
        %1945 = vmatpush1.bf16.msra.mxu0 %v1812
        %1946 = vmatprep.subr.bf16.mxu0 0
        %1947 = vmatpush1.bf16.msra.mxu0 %v1813
        %1948 = vmatprep.subr.bf16.mxu0 0
        %1949 = vmatpush1.bf16.msra.mxu0 %v1814
        %1950 = vmatprep.subr.bf16.mxu0 0
        %1951 = vmatpush1.bf16.msra.mxu0 %v1815
        %1952 = vmatprep.subr.bf16.mxu0 0
        %1953 = vmatpush1.bf16.msra.mxu0 0
        %1954 = vmatprep.subr.bf16.mxu0 0
        %1955 = vmatpush1.bf16.msra.mxu0 0
        %1956 = vmatprep.subr.bf16.mxu0 0
        %1957 = vmatpush1.bf16.msra.mxu0 0
        %1958 = vmatprep.subr.bf16.mxu0 0
        %1959 = vmatpush1.bf16.msra.mxu0 0
        %1960 = vmatprep.subr.bf16.mxu0 0
        %1961 = vmatpush1.bf16.msra.mxu0 0
        %1962 = vmatprep.subr.bf16.mxu0 0
        %1963 = vmatpush1.bf16.msra.mxu0 0
        %1964 = vmatprep.subr.bf16.mxu0 0
        %1965 = vmatpush1.bf16.msra.mxu0 0
        %1966 = vmatprep.subr.bf16.mxu0 0
        %1967 = vmatpush1.bf16.msra.mxu0 0
        %1968 = vmatprep.mubr.bf16.mxu0 0
        %1969 = vmatmul.mubr.bf16.gmra.mrb[0].mxu0 %v753
        %v1970 = vpop.f32.mrb[0].mxu0
        %v1971 = vadd.f32 %v1922, %v1970
        %v1972 = vpop.f32.mrb[0].mxu0
        %v1973 = vpop.f32.mrb[0].mxu0
        %v1974 = vadd.f32 %v1925, %v1973
        %v1975 = vpop.f32.mrb[0].mxu0
        %1976 = vmatprep.mubr.bf16.mxu0 0
        %1977 = vmatmul.mubr.bf16.gmra.mrb[0].mxu0 %v754
        %v1978 = vpop.f32.mrb[0].mxu0
        %v1979 = vadd.f32 %v1930, %v1978
        %v1980 = vpop.f32.mrb[0].mxu0
        %v1981 = vpop.f32.mrb[0].mxu0
        %v1982 = vadd.f32 %v1933, %v1981
        %v1983 = vpop.f32.mrb[0].mxu0
        %1984 = vdwg.mxu0
        %v1985 = vadd.f32 %v1971, %v1876
        %v1986 = vadd.f32 %v1974, %v1876
        %v1987 = vadd.f32 %v1979, %v1876
        %v1988 = vadd.f32 %v1982, %v1876
        %v1989 = vmax.f32 %v1985, 0.0
        %v1990 = vmax.f32 %v1986, 0.0
        %v1991 = vmax.f32 %v1987, 0.0
        %v1992 = vmax.f32 %v1988, 0.0
        %v1993 = vpack.c.bf16 %v1882, %v1881
        %v1994 = vpack.c.bf16 %v1884, %v1883
        %v1995 = vlaneseq
        %v1996 = vshrl.u32 %v1995, 7
        %v1997 = vsub.s32 0, %v1996
        %v1998 = vrot.slane %v1676, %v1997
        %v2015 = vunpack.c.l.b16 %v1659
        %v2016 = vunpack.c.l.b16 %v1660
        %v2017 = vunpack.c.l.b16 %v1661
        %v2018 = vunpack.c.l.b16 %v1662
        %v2019 = vunpack.c.l.b16 %v1663
        %v2020 = vunpack.c.l.b16 %v1664
        %v2021 = vunpack.c.l.b16 %v1665
        %v2022 = vunpack.c.l.b16 %v1666
        %v2023 = vunpack.c.l.b16 %v1667
        %v2024 = vunpack.c.l.b16 %v1668
        %v2025 = vunpack.c.l.b16 %v1669
        %v2026 = vunpack.c.l.b16 %v1670
        %v2027 = vunpack.c.l.b16 %v1671
        %v2028 = vunpack.c.l.b16 %v1672
        %v2029 = vunpack.c.l.b16 %v1673
        %v2030 = vunpack.c.l.b16 %v1674
        %v2031 = vpack.c.b16 %v2016, %v2015
        %v2032 = vpack.c.b16 %v2018, %v2017
        %v2033 = vpack.c.b16 %v2020, %v2019
        %v2034 = vpack.c.b16 %v2022, %v2021
        %v2035 = vpack.c.b16 %v2024, %v2023
        %v2036 = vpack.c.b16 %v2026, %v2025
        %v2037 = vpack.c.b16 %v2028, %v2027
        %v2038 = vpack.c.b16 %v2030, %v2029
        %2047 = vmatprep.subr.bf16.mxu0 0
        %2048 = vmatpush1.bf16.msra.mxu0 %v2031
        %2049 = vmatprep.subr.bf16.mxu0 0
        %2050 = vmatpush1.bf16.msra.mxu0 %v2032
        %2051 = vmatprep.subr.bf16.mxu0 0
        %2052 = vmatpush1.bf16.msra.mxu0 %v2033
        %2053 = vmatprep.subr.bf16.mxu0 0
        %2054 = vmatpush1.bf16.msra.mxu0 %v2034
        %2055 = vmatprep.subr.bf16.mxu0 0
        %2056 = vmatpush1.bf16.msra.mxu0 %v2035
        %2057 = vmatprep.subr.bf16.mxu0 0
        %2058 = vmatpush1.bf16.msra.mxu0 %v2036
        %2059 = vmatprep.subr.bf16.mxu0 0
        %2060 = vmatpush1.bf16.msra.mxu0 %v2037
        %2061 = vmatprep.subr.bf16.mxu0 0
        %2062 = vmatpush1.bf16.msra.mxu0 %v2038
        %2063 = vmatprep.subr.bf16.mxu0 0
        %2064 = vmatpush1.bf16.msra.mxu0 0
        %2065 = vmatprep.subr.bf16.mxu0 0
        %2066 = vmatpush1.bf16.msra.mxu0 0
        %2067 = vmatprep.subr.bf16.mxu0 0
        %2068 = vmatpush1.bf16.msra.mxu0 0
        %2069 = vmatprep.subr.bf16.mxu0 0
        %2070 = vmatpush1.bf16.msra.mxu0 0
        %2071 = vmatprep.subr.bf16.mxu0 0
        %2072 = vmatpush1.bf16.msra.mxu0 0
        %2073 = vmatprep.subr.bf16.mxu0 0
        %2074 = vmatpush1.bf16.msra.mxu0 0
        %2075 = vmatprep.subr.bf16.mxu0 0
        %2076 = vmatpush1.bf16.msra.mxu0 0
        %2077 = vmatprep.subr.bf16.mxu0 0
        %2078 = vmatpush1.bf16.msra.mxu0 0
        %2079 = vmatprep.mubr.bf16.mxu0 0
        %2080 = vmatmul.mubr.bf16.gmra.mrb[0].mxu0 %v1993
        %v2081 = vpop.f32.mrb[0].mxu0
        %v2082 = vadd.f32 %v1998, %v2081
        %v2083 = vpop.f32.mrb[0].mxu0
        %v2084 = vpop.f32.mrb[0].mxu0
        %v2085 = vadd.f32 %v1998, %v2084
        %v2086 = vpop.f32.mrb[0].mxu0
        %2087 = vmatprep.mubr.bf16.mxu0 0
        %2088 = vmatmul.mubr.bf16.gmra.mrb[0].mxu0 %v1994
        %v2089 = vpop.f32.mrb[0].mxu0
        %v2090 = vadd.f32 %v1998, %v2089
        %v2091 = vpop.f32.mrb[0].mxu0
        %v2092 = vpop.f32.mrb[0].mxu0
        %v2093 = vadd.f32 %v1998, %v2092
        %v2094 = vpop.f32.mrb[0].mxu0
        %2095 = vdwg.mxu0
        %v2096 = vmax.f32 %v2082, 0.0
        %v2097 = vmax.f32 %v2085, 0.0
        %v2098 = vmax.f32 %v2090, 0.0
        %v2099 = vmax.f32 %v2093, 0.0
        %v2100 = vpack.c.bf16 %v1990, %v1989
        %v2101 = vpack.c.bf16 %v1992, %v1991
        %2102 = vmatprep.subr.bf16.mxu0 0
        %2103 = vmatpush1.bf16.msra.mxu0 %v2031
        %2104 = vmatprep.subr.bf16.mxu0 0
        %2105 = vmatpush1.bf16.msra.mxu0 %v2032
        %2106 = vmatprep.subr.bf16.mxu0 0
        %2107 = vmatpush1.bf16.msra.mxu0 %v2033
        %2108 = vmatprep.subr.bf16.mxu0 0
        %2109 = vmatpush1.bf16.msra.mxu0 %v2034
        %2110 = vmatprep.subr.bf16.mxu0 0
        %2111 = vmatpush1.bf16.msra.mxu0 %v2035
        %2112 = vmatprep.subr.bf16.mxu0 0
        %2113 = vmatpush1.bf16.msra.mxu0 %v2036
        %2114 = vmatprep.subr.bf16.mxu0 0
        %2115 = vmatpush1.bf16.msra.mxu0 %v2037
        %2116 = vmatprep.subr.bf16.mxu0 0
        %2117 = vmatpush1.bf16.msra.mxu0 %v2038
        %2118 = vmatprep.subr.bf16.mxu0 0
        %2119 = vmatpush1.bf16.msra.mxu0 0
        %2120 = vmatprep.subr.bf16.mxu0 0
        %2121 = vmatpush1.bf16.msra.mxu0 0
        %2122 = vmatprep.subr.bf16.mxu0 0
        %2123 = vmatpush1.bf16.msra.mxu0 0
        %2124 = vmatprep.subr.bf16.mxu0 0
        %2125 = vmatpush1.bf16.msra.mxu0 0
        %2126 = vmatprep.subr.bf16.mxu0 0
        %2127 = vmatpush1.bf16.msra.mxu0 0
        %2128 = vmatprep.subr.bf16.mxu0 0
        %2129 = vmatpush1.bf16.msra.mxu0 0
        %2130 = vmatprep.subr.bf16.mxu0 0
        %2131 = vmatpush1.bf16.msra.mxu0 0
        %2132 = vmatprep.subr.bf16.mxu0 0
        %2133 = vmatpush1.bf16.msra.mxu0 0
        %2134 = vmatprep.mubr.bf16.mxu0 0
        %2135 = vmatmul.mubr.bf16.gmra.mrb[0].mxu0 %v2100
        %v2136 = vpop.f32.mrb[0].mxu0
        %v2137 = vadd.f32 %v1998, %v2136
        %v2138 = vpop.f32.mrb[0].mxu0
        %v2139 = vpop.f32.mrb[0].mxu0
        %v2140 = vadd.f32 %v1998, %v2139
        %v2141 = vpop.f32.mrb[0].mxu0
        %2142 = vmatprep.mubr.bf16.mxu0 0
        %2143 = vmatmul.mubr.bf16.gmra.mrb[0].mxu0 %v2101
        %v2144 = vpop.f32.mrb[0].mxu0
        %v2145 = vadd.f32 %v1998, %v2144
        %v2146 = vpop.f32.mrb[0].mxu0
        %v2147 = vpop.f32.mrb[0].mxu0
        %v2148 = vadd.f32 %v1998, %v2147
        %v2149 = vpop.f32.mrb[0].mxu0
        %2150 = vdwg.mxu0
        %v2151 = vmax.f32 %v2137, 0.0
        %v2152 = vmax.f32 %v2140, 0.0
        %v2153 = vmax.f32 %v2145, 0.0
        %v2154 = vmax.f32 %v2148, 0.0
        %v2155 = vrot.slane %v2096, 4
        %v2156 = vadd.f32 %v2096, %v2155
        %v2157 = vrot.slane %v2156, 2
        %v2158 = vadd.f32 %v2156, %v2157
        %v2159 = vrot.slane %v2158, 1
        %v2160 = vadd.f32 %v2158, %v2159
        %v2161 = vrot.slane %v2097, 4
        %v2162 = vadd.f32 %v2097, %v2161
        %v2163 = vrot.slane %v2162, 2
        %v2164 = vadd.f32 %v2162, %v2163
        %v2165 = vrot.slane %v2164, 1
        %v2166 = vadd.f32 %v2164, %v2165
        %v2167 = vrot.slane %v2098, 4
        %v2168 = vadd.f32 %v2098, %v2167
        %v2169 = vrot.slane %v2168, 2
        %v2170 = vadd.f32 %v2168, %v2169
        %v2171 = vrot.slane %v2170, 1
        %v2172 = vadd.f32 %v2170, %v2171
        %v2173 = vrot.slane %v2099, 4
        %v2174 = vadd.f32 %v2099, %v2173
        %v2175 = vrot.slane %v2174, 2
        %v2176 = vadd.f32 %v2174, %v2175
        %v2177 = vrot.slane %v2176, 1
        %v2178 = vadd.f32 %v2176, %v2177
        %v2179 = vrot.slane %v2151, 4
        %v2180 = vadd.f32 %v2151, %v2179
        %v2181 = vrot.slane %v2180, 2
        %v2182 = vadd.f32 %v2180, %v2181
        %v2183 = vrot.slane %v2182, 1
        %v2184 = vadd.f32 %v2182, %v2183
        %v2185 = vrot.slane %v2152, 4
        %v2186 = vadd.f32 %v2152, %v2185
        %v2187 = vrot.slane %v2186, 2
        %v2188 = vadd.f32 %v2186, %v2187
        %v2189 = vrot.slane %v2188, 1
        %v2190 = vadd.f32 %v2188, %v2189
        %v2191 = vrot.slane %v2153, 4
        %v2192 = vadd.f32 %v2153, %v2191
        %v2193 = vrot.slane %v2192, 2
        %v2194 = vadd.f32 %v2192, %v2193
        %v2195 = vrot.slane %v2194, 1
        %v2196 = vadd.f32 %v2194, %v2195
        %v2197 = vrot.slane %v2154, 4
        %v2198 = vadd.f32 %v2154, %v2197
        %v2199 = vrot.slane %v2198, 2
        %v2200 = vadd.f32 %v2198, %v2199
        %v2201 = vrot.slane %v2200, 1
        %v2202 = vadd.f32 %v2200, %v2201
        %v2203 = vld [vmem:[#allocation10] sm:$0xf]
        %v2204 = vld [vmem:[#allocation10 + $0x4] sm:$0xf]
        %v2205 = vld [vmem:[#allocation10 + $0x8] sm:$0xf]
        %v2206 = vld [vmem:[#allocation10 + $0xc] sm:$0xf]
        %v2207 = vld [vmem:[#allocation10 + $0x10] sm:$0xf]
        %v2208 = vld [vmem:[#allocation10 + $0x14] sm:$0xf]
        %v2209 = vld [vmem:[#allocation10 + $0x18] sm:$0xf]
        %v2210 = vld [vmem:[#allocation10 + $0x1c] sm:$0xf]
        %v2211 = vld [vmem:[#allocation10 + $0x20] sm:$0xf]
        %v2212 = vld [vmem:[#allocation10 + $0x24] sm:$0xf]
        %v2213 = vld [vmem:[#allocation10 + $0x28] sm:$0xf]
        %v2214 = vld [vmem:[#allocation10 + $0x2c] sm:$0xf]
        %v2215 = vld [vmem:[#allocation10 + $0x30] sm:$0xf]
        %v2216 = vld [vmem:[#allocation10 + $0x34] sm:$0xf]
        %v2217 = vld [vmem:[#allocation10 + $0x38] sm:$0xf]
        %v2218 = vld [vmem:[#allocation10 + $0x3c] sm:$0xf]
        %v2219 = vld [vmem:[#allocation10 + $0x40] sm:$0xf]
        %v2220 = vld [vmem:[#allocation10 + $0x44] sm:$0xf]
        %v2221 = vld [vmem:[#allocation10 + $0x48] sm:$0xf]
        %v2222 = vld [vmem:[#allocation10 + $0x4c] sm:$0xf]
        %v2223 = vld [vmem:[#allocation10 + $0x50] sm:$0xf]
        %v2224 = vld [vmem:[#allocation10 + $0x54] sm:$0xf]
        %v2225 = vld [vmem:[#allocation10 + $0x58] sm:$0xf]
        %v2226 = vld [vmem:[#allocation10 + $0x5c] sm:$0xf]
        %v2227 = vld [vmem:[#allocation10 + $0x60] sm:$0xf]
        %v2228 = vld [vmem:[#allocation10 + $0x64] sm:$0xf]
        %v2229 = vld [vmem:[#allocation10 + $0x68] sm:$0xf]
        %v2230 = vld [vmem:[#allocation10 + $0x6c] sm:$0xf]
        %v2231 = vld [vmem:[#allocation10 + $0x70] sm:$0xf]
        %v2232 = vld [vmem:[#allocation10 + $0x74] sm:$0xf]
        %v2233 = vld [vmem:[#allocation10 + $0x78] sm:$0xf]
        %v2234 = vld [vmem:[#allocation10 + $0x7c] sm:$0xf]
        %v2235 = vld [vmem:[#allocation10 + $0x80] sm:$0xf]
        %v2236 = vld [vmem:[#allocation10 + $0x84] sm:$0xf]
        %v2237 = vld [vmem:[#allocation10 + $0x88] sm:$0xf]
        %v2238 = vld [vmem:[#allocation10 + $0x8c] sm:$0xf]
        %v2239 = vld [vmem:[#allocation10 + $0x90] sm:$0xf]
        %v2240 = vld [vmem:[#allocation10 + $0x94] sm:$0xf]
        %v2241 = vld [vmem:[#allocation10 + $0x98] sm:$0xf]
        %v2242 = vld [vmem:[#allocation10 + $0x9c] sm:$0xf]
        %v2243 = vld [vmem:[#allocation10 + $0xa0] sm:$0xf]
        %v2244 = vld [vmem:[#allocation10 + $0xa4] sm:$0xf]
        %v2245 = vld [vmem:[#allocation10 + $0xa8] sm:$0xf]
        %v2246 = vld [vmem:[#allocation10 + $0xac] sm:$0xf]
        %v2247 = vld [vmem:[#allocation10 + $0xb0] sm:$0xf]
        %v2248 = vld [vmem:[#allocation10 + $0xb4] sm:$0xf]
        %v2249 = vld [vmem:[#allocation10 + $0xb8] sm:$0xf]
        %v2250 = vld [vmem:[#allocation10 + $0xbc] sm:$0xf]
        %v2251 = vld [vmem:[%s7] sm:$0x1]
        %v2252 = vld [vmem:[%s7 + $0x1] sm:$0x1]
        %v2253 = vpack.c.bf16 %v2160, %v2160
        %v2254 = vpack.c.bf16 %v2166, %v2166
        %v2255 = vpack.c.bf16 %v2172, %v2172
        %v2256 = vpack.c.bf16 %v2178, %v2178
        %v2257 = vpack.c.bf16 %v2184, %v2184
        %v2258 = vpack.c.bf16 %v2190, %v2190
        %v2259 = vpack.c.bf16 %v2196, %v2196
        %v2260 = vpack.c.bf16 %v2202, %v2202
        %v2265 = vunpack.c.l.b16 %v2257
        %v2266 = vunpack.c.l.b16 %v2258
        %v2267 = vunpack.c.l.b16 %v2259
        %v2268 = vunpack.c.l.b16 %v2260
        %vm2269 = vcmask 1041409
        %v2270 = vsel %vm2269, %v2266, %v2265
        %vm2271 = vcmask 1042434
        %v2272 = vsel %vm2271, %v2267, %v2270
        %vm2273 = vcmask 1043459
        %v2274 = vsel %vm2273, %v2268, %v2272
        %v2275 = vpack.c.b16 %v2274, %v2274
        %v2293 = vunpack.c.l.b16 %v2219
        %v2294 = vunpack.c.l.b16 %v2220
        %v2295 = vunpack.c.l.b16 %v2221
        %v2296 = vunpack.c.l.b16 %v2222
        %v2297 = vunpack.c.l.b16 %v2223
        %v2298 = vunpack.c.l.b16 %v2224
        %v2299 = vunpack.c.l.b16 %v2225
        %v2300 = vunpack.c.l.b16 %v2226
        %v2301 = vunpack.c.l.b16 %v2227
        %v2302 = vunpack.c.l.b16 %v2228
        %v2303 = vunpack.c.l.b16 %v2229
        %v2304 = vunpack.c.l.b16 %v2230
        %v2305 = vunpack.c.l.b16 %v2231
        %v2306 = vunpack.c.l.b16 %v2232
        %v2307 = vunpack.c.l.b16 %v2233
        %v2308 = vunpack.c.l.b16 %v2234
        %v2309 = vpack.c.b16 %v2294, %v2293
        %v2310 = vpack.c.b16 %v2296, %v2295
        %v2311 = vpack.c.b16 %v2298, %v2297
        %v2312 = vpack.c.b16 %v2300, %v2299
        %v2313 = vpack.c.b16 %v2302, %v2301
        %v2314 = vpack.c.b16 %v2304, %v2303
        %v2315 = vpack.c.b16 %v2306, %v2305
        %v2316 = vpack.c.b16 %v2308, %v2307
        %2325 = vmatprep.subr.bf16.mxu0 0
        %2326 = vmatpush1.bf16.msra.mxu0 %v2309
        %2327 = vmatprep.subr.bf16.mxu0 0
        %2328 = vmatpush1.bf16.msra.mxu0 %v2310
        %2329 = vmatprep.subr.bf16.mxu0 0
        %2330 = vmatpush1.bf16.msra.mxu0 %v2311
        %2331 = vmatprep.subr.bf16.mxu0 0
        %2332 = vmatpush1.bf16.msra.mxu0 %v2312
        %2333 = vmatprep.subr.bf16.mxu0 0
        %2334 = vmatpush1.bf16.msra.mxu0 %v2313
        %2335 = vmatprep.subr.bf16.mxu0 0
        %2336 = vmatpush1.bf16.msra.mxu0 %v2314
        %2337 = vmatprep.subr.bf16.mxu0 0
        %2338 = vmatpush1.bf16.msra.mxu0 %v2315
        %2339 = vmatprep.subr.bf16.mxu0 0
        %2340 = vmatpush1.bf16.msra.mxu0 %v2316
        %2341 = vmatprep.subr.bf16.mxu0 0
        %2342 = vmatpush1.bf16.msra.mxu0 0
        %2343 = vmatprep.subr.bf16.mxu0 0
        %2344 = vmatpush1.bf16.msra.mxu0 0
        %2345 = vmatprep.subr.bf16.mxu0 0
        %2346 = vmatpush1.bf16.msra.mxu0 0
        %2347 = vmatprep.subr.bf16.mxu0 0
        %2348 = vmatpush1.bf16.msra.mxu0 0
        %2349 = vmatprep.subr.bf16.mxu0 0
        %2350 = vmatpush1.bf16.msra.mxu0 0
        %2351 = vmatprep.subr.bf16.mxu0 0
        %2352 = vmatpush1.bf16.msra.mxu0 0
        %2353 = vmatprep.subr.bf16.mxu0 0
        %2354 = vmatpush1.bf16.msra.mxu0 0
        %2355 = vmatprep.subr.bf16.mxu0 0
        %2356 = vmatpush1.bf16.msra.mxu0 0
        %2357 = vmatprep.mubr.bf16.mxu0 0
        %2358 = vmatmul.mubr.bf16.gmra.mrb[0].mxu0 %v2275
        %v2359 = vpop.f32.mrb[0].mxu0
        %v2360 = vadd.f32 0.0, %v2359
        %v2361 = vpop.f32.mrb[0].mxu0
        %v2362 = vpop.f32.mrb[0].mxu0
        %v2363 = vpop.f32.mrb[0].mxu0
        %2364 = vdwg.mxu0
        %v2369 = vunpack.c.l.b16 %v2253
        %v2370 = vunpack.c.l.b16 %v2254
        %v2371 = vunpack.c.l.b16 %v2255
        %v2372 = vunpack.c.l.b16 %v2256
        %v2373 = vsel %vm2269, %v2370, %v2369
        %v2374 = vsel %vm2271, %v2371, %v2373
        %v2375 = vsel %vm2273, %v2372, %v2374
        %v2376 = vpack.c.b16 %v2375, %v2375
        %v2394 = vunpack.c.l.b16 %v2203
        %v2395 = vunpack.c.l.b16 %v2204
        %v2396 = vunpack.c.l.b16 %v2205
        %v2397 = vunpack.c.l.b16 %v2206
        %v2398 = vunpack.c.l.b16 %v2207
        %v2399 = vunpack.c.l.b16 %v2208
        %v2400 = vunpack.c.l.b16 %v2209
        %v2401 = vunpack.c.l.b16 %v2210
        %v2402 = vunpack.c.l.b16 %v2211
        %v2403 = vunpack.c.l.b16 %v2212
        %v2404 = vunpack.c.l.b16 %v2213
        %v2405 = vunpack.c.l.b16 %v2214
        %v2406 = vunpack.c.l.b16 %v2215
        %v2407 = vunpack.c.l.b16 %v2216
        %v2408 = vunpack.c.l.b16 %v2217
        %v2409 = vunpack.c.l.b16 %v2218
        %v2410 = vpack.c.b16 %v2395, %v2394
        %v2411 = vpack.c.b16 %v2397, %v2396
        %v2412 = vpack.c.b16 %v2399, %v2398
        %v2413 = vpack.c.b16 %v2401, %v2400
        %v2414 = vpack.c.b16 %v2403, %v2402
        %v2415 = vpack.c.b16 %v2405, %v2404
        %v2416 = vpack.c.b16 %v2407, %v2406
        %v2417 = vpack.c.b16 %v2409, %v2408
        %2426 = vmatprep.subr.bf16.mxu0 0
        %2427 = vmatpush1.bf16.msra.mxu0 %v2410
        %2428 = vmatprep.subr.bf16.mxu0 0
        %2429 = vmatpush1.bf16.msra.mxu0 %v2411
        %2430 = vmatprep.subr.bf16.mxu0 0
        %2431 = vmatpush1.bf16.msra.mxu0 %v2412
        %2432 = vmatprep.subr.bf16.mxu0 0
        %2433 = vmatpush1.bf16.msra.mxu0 %v2413
        %2434 = vmatprep.subr.bf16.mxu0 0
        %2435 = vmatpush1.bf16.msra.mxu0 %v2414
        %2436 = vmatprep.subr.bf16.mxu0 0
        %2437 = vmatpush1.bf16.msra.mxu0 %v2415
        %2438 = vmatprep.subr.bf16.mxu0 0
        %2439 = vmatpush1.bf16.msra.mxu0 %v2416
        %2440 = vmatprep.subr.bf16.mxu0 0
        %2441 = vmatpush1.bf16.msra.mxu0 %v2417
        %2442 = vmatprep.subr.bf16.mxu0 0
        %2443 = vmatpush1.bf16.msra.mxu0 0
        %2444 = vmatprep.subr.bf16.mxu0 0
        %2445 = vmatpush1.bf16.msra.mxu0 0
        %2446 = vmatprep.subr.bf16.mxu0 0
        %2447 = vmatpush1.bf16.msra.mxu0 0
        %2448 = vmatprep.subr.bf16.mxu0 0
        %2449 = vmatpush1.bf16.msra.mxu0 0
        %2450 = vmatprep.subr.bf16.mxu0 0
        %2451 = vmatpush1.bf16.msra.mxu0 0
        %2452 = vmatprep.subr.bf16.mxu0 0
        %2453 = vmatpush1.bf16.msra.mxu0 0
        %2454 = vmatprep.subr.bf16.mxu0 0
        %2455 = vmatpush1.bf16.msra.mxu0 0
        %2456 = vmatprep.subr.bf16.mxu0 0
        %2457 = vmatpush1.bf16.msra.mxu0 0
        %2458 = vmatprep.mubr.bf16.mxu0 0
        %2459 = vmatmul.mubr.bf16.gmra.mrb[0].mxu0 %v2376
        %v2460 = vpop.f32.mrb[0].mxu0
        %v2461 = vadd.f32 %v2360, %v2460
        %v2462 = vpop.f32.mrb[0].mxu0
        %v2463 = vpop.f32.mrb[0].mxu0
        %v2464 = vpop.f32.mrb[0].mxu0
        %2465 = vdwg.mxu0
        %v2466 = vlaneseq
        %v2467 = vshrl.u32 %v2466, 7
        %v2468 = vsub.s32 0, %v2467
        %v2469 = vrot.slane %v2251, %v2468
        %v2470 = vadd.f32 %v2461, %v2469
        %v2471 = vmax.f32 %v2470, 0.0
        %v2472 = vpack.c.bf16 %v2471, %v2471
        %v2473 = vlaneseq
        %v2474 = vshrl.u32 %v2473, 7
        %v2475 = vsub.s32 0, %v2474
        %v2476 = vrot.slane %v2252, %v2475
        %v2493 = vunpack.c.l.b16 %v2235
        %v2494 = vunpack.c.l.b16 %v2236
        %v2495 = vunpack.c.l.b16 %v2237
        %v2496 = vunpack.c.l.b16 %v2238
        %v2497 = vunpack.c.l.b16 %v2239
        %v2498 = vunpack.c.l.b16 %v2240
        %v2499 = vunpack.c.l.b16 %v2241
        %v2500 = vunpack.c.l.b16 %v2242
        %v2501 = vunpack.c.l.b16 %v2243
        %v2502 = vunpack.c.l.b16 %v2244
        %v2503 = vunpack.c.l.b16 %v2245
        %v2504 = vunpack.c.l.b16 %v2246
        %v2505 = vunpack.c.l.b16 %v2247
        %v2506 = vunpack.c.l.b16 %v2248
        %v2507 = vunpack.c.l.b16 %v2249
        %v2508 = vunpack.c.l.b16 %v2250
        %v2509 = vpack.c.b16 %v2494, %v2493
        %v2510 = vpack.c.b16 %v2496, %v2495
        %v2511 = vpack.c.b16 %v2498, %v2497
        %v2512 = vpack.c.b16 %v2500, %v2499
        %v2513 = vpack.c.b16 %v2502, %v2501
        %v2514 = vpack.c.b16 %v2504, %v2503
        %v2515 = vpack.c.b16 %v2506, %v2505
        %v2516 = vpack.c.b16 %v2508, %v2507
        %2525 = vmatprep.subr.bf16.mxu0 0
        %2526 = vmatpush1.bf16.msra.mxu0 %v2509
        %2527 = vmatprep.subr.bf16.mxu0 0
        %2528 = vmatpush1.bf16.msra.mxu0 %v2510
        %2529 = vmatprep.subr.bf16.mxu0 0
        %2530 = vmatpush1.bf16.msra.mxu0 %v2511
        %2531 = vmatprep.subr.bf16.mxu0 0
        %2532 = vmatpush1.bf16.msra.mxu0 %v2512
        %2533 = vmatprep.subr.bf16.mxu0 0
        %2534 = vmatpush1.bf16.msra.mxu0 %v2513
        %2535 = vmatprep.subr.bf16.mxu0 0
        %2536 = vmatpush1.bf16.msra.mxu0 %v2514
        %2537 = vmatprep.subr.bf16.mxu0 0
        %2538 = vmatpush1.bf16.msra.mxu0 %v2515
        %2539 = vmatprep.subr.bf16.mxu0 0
        %2540 = vmatpush1.bf16.msra.mxu0 %v2516
        %2541 = vmatprep.subr.bf16.mxu0 0
        %2542 = vmatpush1.bf16.msra.mxu0 0
        %2543 = vmatprep.subr.bf16.mxu0 0
        %2544 = vmatpush1.bf16.msra.mxu0 0
        %2545 = vmatprep.subr.bf16.mxu0 0
        %2546 = vmatpush1.bf16.msra.mxu0 0
        %2547 = vmatprep.subr.bf16.mxu0 0
        %2548 = vmatpush1.bf16.msra.mxu0 0
        %2549 = vmatprep.subr.bf16.mxu0 0
        %2550 = vmatpush1.bf16.msra.mxu0 0
        %2551 = vmatprep.subr.bf16.mxu0 0
        %2552 = vmatpush1.bf16.msra.mxu0 0
        %2553 = vmatprep.subr.bf16.mxu0 0
        %2554 = vmatpush1.bf16.msra.mxu0 0
        %2555 = vmatprep.subr.bf16.mxu0 0
        %2556 = vmatpush1.bf16.msra.mxu0 0
        %2557 = vmatprep.mubr.bf16.mxu0 0
        %2558 = vmatmul.mubr.bf16.gmra.mrb[0].mxu0 %v2472
        %v2559 = vpop.f32.mrb[0].mxu0
        %v2560 = vadd.f32 %v2476, %v2559
        %v2561 = vpop.f32.mrb[0].mxu0
        %v2562 = vpop.f32.mrb[0].mxu0
        %v2563 = vpop.f32.mrb[0].mxu0
        %2564 = vdwg.mxu0
        %v2565 = vmax.f32 %v2560, 0.0
        %v2566 = vld [vmem:[#allocation11] sm:$0xf]
        %v2567 = vld [vmem:[#allocation11 + $0x4] sm:$0xf]
        %v2568 = vld [vmem:[#allocation11 + $0x8] sm:$0xf]
        %v2569 = vld [vmem:[#allocation11 + $0xc] sm:$0xf]
        %v2570 = vld [vmem:[#allocation11 + $0x10] sm:$0xf]
        %v2571 = vld [vmem:[#allocation11 + $0x14] sm:$0xf]
        %v2572 = vld [vmem:[#allocation11 + $0x18] sm:$0xf]
        %v2573 = vld [vmem:[#allocation11 + $0x1c] sm:$0xf]
        %v2574 = vld [vmem:[#allocation11 + $0x20] sm:$0xf]
        %v2575 = vld [vmem:[#allocation11 + $0x24] sm:$0xf]
        %v2576 = vld [vmem:[#allocation11 + $0x28] sm:$0xf]
        %v2577 = vld [vmem:[#allocation11 + $0x2c] sm:$0xf]
        %v2578 = vld [vmem:[#allocation11 + $0x30] sm:$0xf]
        %v2579 = vld [vmem:[#allocation11 + $0x34] sm:$0xf]
        %v2580 = vld [vmem:[#allocation11 + $0x38] sm:$0xf]
        %v2581 = vld [vmem:[#allocation11 + $0x3c] sm:$0xf]
        %v2582 = vpack.c.bf16 %v2565, %v2565
        %v2583 = vld [vmem:[%s9] sm:$0x1]
        %v2585 = vlaneseq
        %v2586 = vshrl.u32 %v2585, 7
        %v2587 = vsub.s32 0, %v2586
        %v2588 = vrot.slane %v2583, %v2587
        %v2606 = vunpack.c.l.b16 %v2566
        %v2607 = vunpack.c.l.b16 %v2567
        %v2608 = vunpack.c.l.b16 %v2568
        %v2609 = vunpack.c.l.b16 %v2569
        %v2610 = vunpack.c.l.b16 %v2570
        %v2611 = vunpack.c.l.b16 %v2571
        %v2612 = vunpack.c.l.b16 %v2572
        %v2613 = vunpack.c.l.b16 %v2573
        %v2614 = vunpack.c.l.b16 %v2574
        %v2615 = vunpack.c.l.b16 %v2575
        %v2616 = vunpack.c.l.b16 %v2576
        %v2617 = vunpack.c.l.b16 %v2577
        %v2618 = vunpack.c.l.b16 %v2578
        %v2619 = vunpack.c.l.b16 %v2579
        %v2620 = vunpack.c.l.b16 %v2580
        %v2621 = vunpack.c.l.b16 %v2581
        %v2622 = vpack.c.b16 %v2607, %v2606
        %v2623 = vpack.c.b16 %v2609, %v2608
        %v2624 = vpack.c.b16 %v2611, %v2610
        %v2625 = vpack.c.b16 %v2613, %v2612
        %v2626 = vpack.c.b16 %v2615, %v2614
        %v2627 = vpack.c.b16 %v2617, %v2616
        %v2628 = vpack.c.b16 %v2619, %v2618
        %v2629 = vpack.c.b16 %v2621, %v2620
        %2638 = vmatprep.subr.bf16.mxu0 0
        %2639 = vmatpush1.bf16.msra.mxu0 %v2622
        %2640 = vmatprep.subr.bf16.mxu0 0
        %2641 = vmatpush1.bf16.msra.mxu0 %v2623
        %2642 = vmatprep.subr.bf16.mxu0 0
        %2643 = vmatpush1.bf16.msra.mxu0 %v2624
        %2644 = vmatprep.subr.bf16.mxu0 0
        %2645 = vmatpush1.bf16.msra.mxu0 %v2625
        %2646 = vmatprep.subr.bf16.mxu0 0
        %2647 = vmatpush1.bf16.msra.mxu0 %v2626
        %2648 = vmatprep.subr.bf16.mxu0 0
        %2649 = vmatpush1.bf16.msra.mxu0 %v2627
        %2650 = vmatprep.subr.bf16.mxu0 0
        %2651 = vmatpush1.bf16.msra.mxu0 %v2628
        %2652 = vmatprep.subr.bf16.mxu0 0
        %2653 = vmatpush1.bf16.msra.mxu0 %v2629
        %2654 = vmatprep.subr.bf16.mxu0 0
        %2655 = vmatpush1.bf16.msra.mxu0 0
        %2656 = vmatprep.subr.bf16.mxu0 0
        %2657 = vmatpush1.bf16.msra.mxu0 0
        %2658 = vmatprep.subr.bf16.mxu0 0
        %2659 = vmatpush1.bf16.msra.mxu0 0
        %2660 = vmatprep.subr.bf16.mxu0 0
        %2661 = vmatpush1.bf16.msra.mxu0 0
        %2662 = vmatprep.subr.bf16.mxu0 0
        %2663 = vmatpush1.bf16.msra.mxu0 0
        %2664 = vmatprep.subr.bf16.mxu0 0
        %2665 = vmatpush1.bf16.msra.mxu0 0
        %2666 = vmatprep.subr.bf16.mxu0 0
        %2667 = vmatpush1.bf16.msra.mxu0 0
        %2668 = vmatprep.subr.bf16.mxu0 0
        %2669 = vmatpush1.bf16.msra.mxu0 0
        %2670 = vmatprep.mubr.bf16.mxu0 0
        %2671 = vmatmul.mubr.bf16.gmra.mrb[0].mxu0 %v2582
        %v2672 = vpop.f32.mrb[0].mxu0
        %v2673 = vadd.f32 %v2588, %v2672
        %v2674 = vpop.f32.mrb[0].mxu0
        %v2675 = vpop.f32.mrb[0].mxu0
        %v2676 = vpop.f32.mrb[0].mxu0
        %2677 = vdwg.mxu0
        %2678 = vst [vmem:[%s475] sm:$0xf] %v2673
        %s2679 = sand.u32 %s260, 1
        %s2680 = scalar_lea.sflag [#allocation4], %s2679
        %s2681 = sand.u32 %s260, 1
        %s2682 = smul.addr %s2681, 4
        %s2683 = scalar_lea.vmem [#allocation13], %s2682
        // Predicated region
        $region85: #{tpu_custom_call.1} parent=59 // pred_check
          %p2684 = pneg %p270
        $region86: #{tpu_custom_call.1} parent=59 // pred_check_branch
          %2686 = sbr.rel (%p2684) target = $region88
        $region87: #{tpu_custom_call.1} parent=59 // pred_region
          %s2688 = ssub.s32 64, 64
          %2689 = vsyncadd %s2680, %s2688
          %s2690 = smul.addr %s32, 64
          %s2691 = scalar_lea.hbm %s10, %s2690
          %s2693 = sshll.u32 %s2683, 4
          %s2694 = int_to_ptr.vmem [resolvable:$true] %s2693
          %2696 = dma.vmem_to_hbm [thread:$0]  %s2694, 64, %s2691, %s2680
        $region88: #{tpu_custom_call.1} parent=59 // pred_fallthru
          _
      $region60: #{tpu_custom_call.1} parent=5 // pred_fallthru
        _
      %p2697 = scmp.le.s32.totalorder 2, %s27
      // Predicated region
      $region89: #{tpu_custom_call.1} parent=5 // pred_check
        %p2698 = pneg %p2697
      $region90: #{tpu_custom_call.1} parent=5 // pred_check_branch
        %2700 = sbr.rel (%p2698) target = $region92
      $region91: #{tpu_custom_call.1} parent=5 // pred_region
        %s2701 = ssub.s32 %s27, 2
        // Predicated region
        $region93: #{tpu_custom_call.1} parent=91 // pred_check
          %p2702 = pneg %p276
        $region94: #{tpu_custom_call.1} parent=91 // pred_check_branch
          %2704 = sbr.rel (%p2702) target = $region96
        $region95: #{tpu_custom_call.1} parent=91 // pred_region
          %s2705 = sand.u32 %s261, 1
          %s2706 = scalar_lea.sflag [#allocation4], %s2705
          %s2707 = sand.u32 %s261, 1
          %s2708 = smul.addr %s2707, 4
          %s2709 = scalar_lea.vmem [#allocation13], %s2708
          %2710 = dma.done %s2706, 64
        $region96: #{tpu_custom_call.1} parent=91 // pred_fallthru
          _
      $region92: #{tpu_custom_call.1} parent=5 // pred_fallthru
        _
    $region6: #{tpu_custom_call.1} parent=1 // loop_footer
      %s31 = sadd.s32 1, %s27
    $region7: #{tpu_custom_call.1} parent=1 // loop_footer_branch
      %26 = sbr.rel target = $region3
    $region8: #{tpu_custom_call.1} parent=1 // loop_exit
      _
    %2711 = vsyncpa [#allocation3], 1
    %s2712 = scalar_lea.sflag [#allocation3], 1
    %2713 = vsyncpa %s2712, 1
    %2714 = vsyncpa [#allocation6], 1
    %s2715 = scalar_lea.sflag [#allocation6], 1
    %2716 = vsyncpa %s2715, 1
    %2717 = vsyncpa [#allocation9], 1
    %2718 = vsyncpa [#allocation12], 1
    %2719 = vsyncpa [#allocation4], 1
    %s2720 = scalar_lea.sflag [#allocation4], 1
    %2721 = vsyncpa %s2720, 1

</llo_original>
